<compile_context>
chip_gen: v5e
topology: v5e:2x2
jax: 0.10.0
libtpu: 0.0.40
codegen_flags: <defaults>
</compile_context>

<pallas_src>
import functools

import jax
import jax.numpy as jnp
from jax.experimental import pallas as pl
from jax.experimental.pallas import tpu as pltpu


# ----------------------------------------------------------------------------
# Fused kernel: one grid step = TILE_N whole images.
#   x_ref    [TILE_N, Cin, Lpad]  bf16   zero-padded image, spatial flattened
#   w_ref    [9, Cout, Cin]       bf16   per-tap conv weights (tap = ki*3 + kj)
#   b_ref    [Cout, 1]            f32    conv bias
#   mask_ref [1, Lv]              f32    1/(H*W) at valid conv positions, else 0
#   wh_ref   [2, Cout]            f32    [fc1 | fc2] weights, pre-transposed
#   bh_ref   [2, 1]               f32    [fc1 | fc2] biases
#   o_ref    [TILE_N, 2, 1]       f32    sigmoid outputs
# ----------------------------------------------------------------------------
def fused_forward_kernel(x_ref, w_ref, b_ref, mask_ref, wh_ref, bh_ref, o_ref,
                         *, taps, lv, tile_n):
    b = b_ref[...]                              # [Cout, 1]
    mask = mask_ref[...]                        # [1, Lv]
    wh = wh_ref[...]                            # [2, Cout]
    bh = bh_ref[...]                            # [2, 1]
    wts = [w_ref[t] for t in range(len(taps))]  # 9 x [Cout, Cin] bf16 (hoisted)

    for n in range(tile_n):
        xn = x_ref[n]                           # [Cin, Lpad] bf16
        # 3x3 conv = 9 shifted-slice matmuls, accumulated in f32 on the MXU.
        d0 = taps[0]
        conv = jnp.dot(wts[0], xn[:, d0:d0 + lv],
                       preferred_element_type=jnp.float32)        # [Cout, Lv]
        for t in range(1, len(taps)):
            d = taps[t]
            conv = conv + jnp.dot(wts[t], xn[:, d:d + lv],
                                  preferred_element_type=jnp.float32)
        conv = jnp.maximum(conv + b, 0.0)                          # bias + ReLU
        # Masked global-average-pool (mask carries the 1/(H*W) scale and zeroes
        # out the padded-column positions of the flattened window).
        feat = jnp.sum(conv * mask, axis=-1, keepdims=True)        # [Cout, 1]
        # Both heads in one tiny matmul, then sigmoid.
        z = jnp.dot(wh, feat, preferred_element_type=jnp.float32) + bh   # [2, 1]
        o_ref[n] = jax.nn.sigmoid(z)


def fused_forward_pallas(x_prep, w_taps, b_conv, mask, wh_t, bh_t,
                         *, lv, taps, tile_n):
    N, C, Lpad = x_prep.shape
    Cout = w_taps.shape[1]
    assert N % tile_n == 0
    nb = N // tile_n

    kernel = functools.partial(fused_forward_kernel,
                               taps=taps, lv=lv, tile_n=tile_n)

    # Scheduler hints reflecting the new (im2col-free, bf16) traffic profile.
    flops = 2 * N * lv * C * Cout * len(taps) + 2 * N * Cout * 2
    bytes_accessed = (2 * x_prep.size + 2 * w_taps.size
                      + 4 * (b_conv.size + mask.size + wh_t.size + bh_t.size)
                      + 4 * N * 2)

    # VMEM budget from actual block sizes (double-buffered operands + rough
    # in-kernel intermediates), clamped so it also fits v7x's 64 MiB VMEM.
    x_block = tile_n * C * Lpad * 2
    const_blocks = 2 * w_taps.size + 4 * (b_conv.size + mask.size
                                          + wh_t.size + bh_t.size)
    out_block = tile_n * 2 * 4
    interm = tile_n * (Cout * lv * 4 + 2 * C * Lpad * 4)
    vmem_limit = int(min(100 * 2**20,
                         max(8 * 2**20,
                             2 * (x_block + const_blocks + out_block) + interm)))

    return pl.pallas_call(
        kernel,
        out_shape=jax.ShapeDtypeStruct((N, 2, 1), jnp.float32),
        grid=(nb,),
        in_specs=[
            pl.BlockSpec((tile_n, C, Lpad), lambda i: (i, 0, 0)),
            pl.BlockSpec((len(taps), Cout, C), lambda i: (0, 0, 0)),
            pl.BlockSpec((Cout, 1), lambda i: (0, 0)),
            pl.BlockSpec((1, lv), lambda i: (0, 0)),
            pl.BlockSpec((2, Cout), lambda i: (0, 0)),
            pl.BlockSpec((2, 1), lambda i: (0, 0)),
        ],
        out_specs=pl.BlockSpec((tile_n, 2, 1), lambda i: (i, 0, 0)),
        compiler_params=pltpu.CompilerParams(
            dimension_semantics=("parallel",),
            vmem_limit_bytes=vmem_limit,
        ),
        cost_estimate=pl.CostEstimate(
            flops=flops, transcendentals=2 * N, bytes_accessed=bytes_accessed),
    )(x_prep, w_taps, b_conv, mask, wh_t, bh_t)


def _pick_tile_n(n, cap=8):
    """Largest divisor of n that is <= cap while leaving >= 2 grid steps."""
    target = min(cap, max(1, n // 2)) if n >= 2 else 1
    for d in range(target, 0, -1):
        if n % d == 0:
            return d
    return 1


# ----------------------------------------------------------------------------
# Full model forward (matches PyTorch Model.forward: returns (out1, out2)).
# Host-side glue is raw-sized only: zero-pad, flatten spatial, pad to a
# 128-multiple, cast to bf16.  No 9x im2col stream.
# ----------------------------------------------------------------------------
def model_forward(x_nchw, params, *, tile_n=None):
    N, C, H, W = x_nchw.shape
    Cout = params["conv_w"].shape[0]
    Hp, Wp = H + 2, W + 2
    S = Hp * Wp
    Lpad = ((S + 127) // 128) * 128          # lane-dense flattened spatial length
    Lv = (H - 1) * Wp + W                    # conv-output window length
    taps = tuple(ki * Wp + kj for ki in range(3) for kj in range(3))
    if tile_n is None:
        tile_n = _pick_tile_n(N)

    # Image prep: SAME zero-pad, flatten (Hp, Wp) -> S, pad to Lpad, bf16.
    xp = jnp.pad(x_nchw, ((0, 0), (0, 0), (1, 1), (1, 1)))
    xf = jnp.pad(xp.reshape(N, C, S), ((0, 0), (0, 0), (0, Lpad - S)))
    x_prep = xf.astype(jnp.bfloat16)

    # Conv weight [Cout, Cin, 3, 3] -> per-tap [9, Cout, Cin] (tap = ki*3 + kj).
    w_taps = jnp.transpose(params["conv_w"], (2, 3, 0, 1)).reshape(9, Cout, C)
    w_taps = w_taps.astype(jnp.bfloat16)
    b_conv = params["conv_b"].reshape(Cout, 1).astype(jnp.float32)

    # Pooling mask over the flattened conv-output window: position p maps to
    # padded column (p + Wp + 1) % Wp; columns in [1, W] are real outputs.
    p = jnp.arange(Lv)
    col = (p + Wp + 1) % Wp
    mask = jnp.where((col >= 1) & (col <= W), 1.0 / (H * W), 0.0)
    mask = mask.reshape(1, Lv).astype(jnp.float32)

    # Fuse the two width-1 heads into one [2, Cout] matmul (pre-transposed).
    wh_t = jnp.concatenate([params["fc1_w"], params["fc2_w"]],
                           axis=1).T.astype(jnp.float32)             # [2, Cout]
    bh_t = jnp.concatenate([params["fc1_b"], params["fc2_b"]],
                           axis=1).T.astype(jnp.float32)             # [2, 1]

    out = fused_forward_pallas(x_prep, w_taps, b_conv, mask, wh_t, bh_t,
                               lv=Lv, taps=taps, tile_n=tile_n)      # [N, 2, 1]
    out1 = out[:, 0, :]                                              # [N, 1]
    out2 = out[:, 1, :]                                              # [N, 1]
    return out1, out2


def init_params(key, cin=4, cout=32):
    k = jax.random.split(key, 6)
    s_conv = 1.0 / (cin * 9) ** 0.5
    s_fc = 1.0 / cout ** 0.5
    return {
        "conv_w": jax.random.uniform(k[0], (cout, cin, 3, 3), jnp.float32, -s_conv, s_conv),
        "conv_b": jax.random.uniform(k[1], (cout,), jnp.float32, -s_conv, s_conv),
        "fc1_w": jax.random.uniform(k[2], (cout, 1), jnp.float32, -s_fc, s_fc),
        "fc1_b": jax.random.uniform(k[3], (1, 1), jnp.float32, -s_fc, s_fc),
        "fc2_w": jax.random.uniform(k[4], (cout, 1), jnp.float32, -s_fc, s_fc),
        "fc2_b": jax.random.uniform(k[5], (1, 1), jnp.float32, -s_fc, s_fc),
    }


if __name__ == "__main__":
    key = jax.random.PRNGKey(0)
    kx, kp = jax.random.split(key)

    N, C, H, W = 2, 4, 16, 16          # small NCHW input (PyTorch convention)
    x = jax.random.normal(kx, (N, C, H, W), jnp.float32)
    params = init_params(kp, cin=C, cout=32)

    # N=2 -> tile_n=1 -> grid (2,): two 'parallel' grid steps (both TCs on v7x).
    fwd = jax.jit(model_forward)
    out1, out2 = fwd(x, params)
    jax.block_until_ready((out1, out2))

    # sanity: shapes [N,1], sigmoid range (0,1)
    assert out1.shape == (N, 1) and out2.shape == (N, 1)
    assert bool(jnp.all((out1 > 0) & (out1 < 1))) and bool(jnp.all((out2 > 0) & (out2 < 1)))

    # cross-check against a pure-JAX f32 reference of the same math
    # (kernel uses bf16 image/conv weights with f32 accumulation -> loose tol)
    def ref(xv, p):
        conv = jax.lax.conv_general_dilated(
            xv, p["conv_w"], (1, 1), "SAME",
            dimension_numbers=("NCHW", "OIHW", "NCHW"))
        conv = jnp.maximum(conv + p["conv_b"][None, :, None, None], 0.0)
        feat = conv.mean(axis=(2, 3))                       # [N, Cout]
        o1 = jax.nn.sigmoid(feat @ p["fc1_w"] + p["fc1_b"])
        o2 = jax.nn.sigmoid(feat @ p["fc2_w"] + p["fc2_b"])
        return o1, o2

    r1, r2 = ref(x, params)
    assert jnp.allclose(out1, r1, atol=1e-2, rtol=1e-2)
    assert jnp.allclose(out2, r2, atol=1e-2, rtol=1e-2)

    print("KERNEL_OK")
</pallas_src>

<mosaic_0001>
module attributes {stable_mosaic.version = 11 : i64} {
  func.func @fused_forward_kernel(%arg0: i32, %arg1: memref<1x4x384xbf16, #tpu.memory_space<vmem>>, %arg2: memref<9x32x4xbf16, #tpu.memory_space<vmem>>, %arg3: memref<32x1xf32, #tpu.memory_space<vmem>>, %arg4: memref<1x286xf32, #tpu.memory_space<vmem>>, %arg5: memref<2x32xf32, #tpu.memory_space<vmem>>, %arg6: memref<2x1xf32, #tpu.memory_space<vmem>>, %arg7: memref<1x2x1xf32, #tpu.memory_space<vmem>>) attributes {dimension_semantics = [#tpu.dimension_semantics<parallel>], iteration_bounds = array<i64: 2>, scalar_prefetch = 0 : i64, scratch_operands = 0 : i64, tpu.core_type = #tpu.core_type<tc>, window_params = [{transform_indices = @transform_0, window_bounds = array<i64: 1, 4, 384>}, {pipeline_mode = #tpu.pipeline_mode<synchronous>, transform_indices = @transform_1, window_bounds = array<i64: 9, 32, 4>}, {pipeline_mode = #tpu.pipeline_mode<synchronous>, transform_indices = @transform_2, window_bounds = array<i64: 32, 1>}, {pipeline_mode = #tpu.pipeline_mode<synchronous>, transform_indices = @transform_3, window_bounds = array<i64: 1, 286>}, {pipeline_mode = #tpu.pipeline_mode<synchronous>, transform_indices = @transform_4, window_bounds = array<i64: 2, 32>}, {pipeline_mode = #tpu.pipeline_mode<synchronous>, transform_indices = @transform_5, window_bounds = array<i64: 2, 1>}, {transform_indices = @transform_6, window_bounds = array<i64: 1, 2, 1>}]} {
    %c0 = arith.constant 0 : index
    %c0_0 = arith.constant 0 : index
    %0 = vector.load %arg3[%c0, %c0_0] : memref<32x1xf32, #tpu.memory_space<vmem>>, vector<32x1xf32>
    %c0_1 = arith.constant 0 : index
    %c0_2 = arith.constant 0 : index
    %1 = vector.load %arg4[%c0_1, %c0_2] : memref<1x286xf32, #tpu.memory_space<vmem>>, vector<1x286xf32>
    %c0_3 = arith.constant 0 : index
    %c0_4 = arith.constant 0 : index
    %2 = vector.load %arg5[%c0_3, %c0_4] : memref<2x32xf32, #tpu.memory_space<vmem>>, vector<2x32xf32>
    %c0_5 = arith.constant 0 : index
    %c0_6 = arith.constant 0 : index
    %3 = vector.load %arg6[%c0_5, %c0_6] : memref<2x1xf32, #tpu.memory_space<vmem>>, vector<2x1xf32>
    %c0_7 = arith.constant 0 : index
    %c0_8 = arith.constant 0 : index
    %c0_9 = arith.constant 0 : index
    %4 = vector.load %arg2[%c0_7, %c0_8, %c0_9] : memref<9x32x4xbf16, #tpu.memory_space<vmem>>, vector<1x32x4xbf16>
    %5 = vector.shape_cast %4 : vector<1x32x4xbf16> to vector<32x4xbf16>
    %c1 = arith.constant 1 : index
    %c0_10 = arith.constant 0 : index
    %c0_11 = arith.constant 0 : index
    %6 = vector.load %arg2[%c1, %c0_10, %c0_11] : memref<9x32x4xbf16, #tpu.memory_space<vmem>>, vector<1x32x4xbf16>
    %7 = vector.shape_cast %6 : vector<1x32x4xbf16> to vector<32x4xbf16>
    %c2 = arith.constant 2 : index
    %c0_12 = arith.constant 0 : index
    %c0_13 = arith.constant 0 : index
    %8 = vector.load %arg2[%c2, %c0_12, %c0_13] : memref<9x32x4xbf16, #tpu.memory_space<vmem>>, vector<1x32x4xbf16>
    %9 = vector.shape_cast %8 : vector<1x32x4xbf16> to vector<32x4xbf16>
    %c3 = arith.constant 3 : index
    %c0_14 = arith.constant 0 : index
    %c0_15 = arith.constant 0 : index
    %10 = vector.load %arg2[%c3, %c0_14, %c0_15] : memref<9x32x4xbf16, #tpu.memory_space<vmem>>, vector<1x32x4xbf16>
    %11 = vector.shape_cast %10 : vector<1x32x4xbf16> to vector<32x4xbf16>
    %c4 = arith.constant 4 : index
    %c0_16 = arith.constant 0 : index
    %c0_17 = arith.constant 0 : index
    %12 = vector.load %arg2[%c4, %c0_16, %c0_17] : memref<9x32x4xbf16, #tpu.memory_space<vmem>>, vector<1x32x4xbf16>
    %13 = vector.shape_cast %12 : vector<1x32x4xbf16> to vector<32x4xbf16>
    %c5 = arith.constant 5 : index
    %c0_18 = arith.constant 0 : index
    %c0_19 = arith.constant 0 : index
    %14 = vector.load %arg2[%c5, %c0_18, %c0_19] : memref<9x32x4xbf16, #tpu.memory_space<vmem>>, vector<1x32x4xbf16>
    %15 = vector.shape_cast %14 : vector<1x32x4xbf16> to vector<32x4xbf16>
    %c6 = arith.constant 6 : index
    %c0_20 = arith.constant 0 : index
    %c0_21 = arith.constant 0 : index
    %16 = vector.load %arg2[%c6, %c0_20, %c0_21] : memref<9x32x4xbf16, #tpu.memory_space<vmem>>, vector<1x32x4xbf16>
    %17 = vector.shape_cast %16 : vector<1x32x4xbf16> to vector<32x4xbf16>
    %c7 = arith.constant 7 : index
    %c0_22 = arith.constant 0 : index
    %c0_23 = arith.constant 0 : index
    %18 = vector.load %arg2[%c7, %c0_22, %c0_23] : memref<9x32x4xbf16, #tpu.memory_space<vmem>>, vector<1x32x4xbf16>
    %19 = vector.shape_cast %18 : vector<1x32x4xbf16> to vector<32x4xbf16>
    %c8 = arith.constant 8 : index
    %c0_24 = arith.constant 0 : index
    %c0_25 = arith.constant 0 : index
    %20 = vector.load %arg2[%c8, %c0_24, %c0_25] : memref<9x32x4xbf16, #tpu.memory_space<vmem>>, vector<1x32x4xbf16>
    %21 = vector.shape_cast %20 : vector<1x32x4xbf16> to vector<32x4xbf16>
    %c0_26 = arith.constant 0 : index
    %c0_27 = arith.constant 0 : index
    %c0_28 = arith.constant 0 : index
    %22 = vector.load %arg1[%c0_26, %c0_27, %c0_28] : memref<1x4x384xbf16, #tpu.memory_space<vmem>>, vector<1x4x384xbf16>
    %23 = vector.shape_cast %22 : vector<1x4x384xbf16> to vector<4x384xbf16>
    %24 = vector.extract_strided_slice %23 {offsets = [0, 0], sizes = [4, 286], strides = [1, 1]} : vector<4x384xbf16> to vector<4x286xbf16>
    %cst = arith.constant dense<0.000000e+00> : vector<32x286xf32>
    %25 = tpu.matmul %5, %24, %cst {dimension_numbers = #tpu.dot_dimension_numbers<[1], [0], [0], [1], [0, 0, 1, 1], [], []>} : vector<32x4xbf16>, vector<4x286xbf16>, vector<32x286xf32> -> vector<32x286xf32>
    %26 = vector.extract_strided_slice %23 {offsets = [0, 1], sizes = [4, 286], strides = [1, 1]} : vector<4x384xbf16> to vector<4x286xbf16>
    %cst_29 = arith.constant dense<0.000000e+00> : vector<32x286xf32>
    %27 = tpu.matmul %7, %26, %cst_29 {dimension_numbers = #tpu.dot_dimension_numbers<[1], [0], [0], [1], [0, 0, 1, 1], [], []>} : vector<32x4xbf16>, vector<4x286xbf16>, vector<32x286xf32> -> vector<32x286xf32>
    %28 = arith.addf %25, %27 : vector<32x286xf32>
    %29 = vector.extract_strided_slice %23 {offsets = [0, 2], sizes = [4, 286], strides = [1, 1]} : vector<4x384xbf16> to vector<4x286xbf16>
    %cst_30 = arith.constant dense<0.000000e+00> : vector<32x286xf32>
    %30 = tpu.matmul %9, %29, %cst_30 {dimension_numbers = #tpu.dot_dimension_numbers<[1], [0], [0], [1], [0, 0, 1, 1], [], []>} : vector<32x4xbf16>, vector<4x286xbf16>, vector<32x286xf32> -> vector<32x286xf32>
    %31 = arith.addf %28, %30 : vector<32x286xf32>
    %32 = vector.extract_strided_slice %23 {offsets = [0, 18], sizes = [4, 286], strides = [1, 1]} : vector<4x384xbf16> to vector<4x286xbf16>
    %cst_31 = arith.constant dense<0.000000e+00> : vector<32x286xf32>
    %33 = tpu.matmul %11, %32, %cst_31 {dimension_numbers = #tpu.dot_dimension_numbers<[1], [0], [0], [1], [0, 0, 1, 1], [], []>} : vector<32x4xbf16>, vector<4x286xbf16>, vector<32x286xf32> -> vector<32x286xf32>
    %34 = arith.addf %31, %33 : vector<32x286xf32>
    %35 = vector.extract_strided_slice %23 {offsets = [0, 19], sizes = [4, 286], strides = [1, 1]} : vector<4x384xbf16> to vector<4x286xbf16>
    %cst_32 = arith.constant dense<0.000000e+00> : vector<32x286xf32>
    %36 = tpu.matmul %13, %35, %cst_32 {dimension_numbers = #tpu.dot_dimension_numbers<[1], [0], [0], [1], [0, 0, 1, 1], [], []>} : vector<32x4xbf16>, vector<4x286xbf16>, vector<32x286xf32> -> vector<32x286xf32>
    %37 = arith.addf %34, %36 : vector<32x286xf32>
    %38 = vector.extract_strided_slice %23 {offsets = [0, 20], sizes = [4, 286], strides = [1, 1]} : vector<4x384xbf16> to vector<4x286xbf16>
    %cst_33 = arith.constant dense<0.000000e+00> : vector<32x286xf32>
    %39 = tpu.matmul %15, %38, %cst_33 {dimension_numbers = #tpu.dot_dimension_numbers<[1], [0], [0], [1], [0, 0, 1, 1], [], []>} : vector<32x4xbf16>, vector<4x286xbf16>, vector<32x286xf32> -> vector<32x286xf32>
    %40 = arith.addf %37, %39 : vector<32x286xf32>
    %41 = vector.extract_strided_slice %23 {offsets = [0, 36], sizes = [4, 286], strides = [1, 1]} : vector<4x384xbf16> to vector<4x286xbf16>
    %cst_34 = arith.constant dense<0.000000e+00> : vector<32x286xf32>
    %42 = tpu.matmul %17, %41, %cst_34 {dimension_numbers = #tpu.dot_dimension_numbers<[1], [0], [0], [1], [0, 0, 1, 1], [], []>} : vector<32x4xbf16>, vector<4x286xbf16>, vector<32x286xf32> -> vector<32x286xf32>
    %43 = arith.addf %40, %42 : vector<32x286xf32>
    %44 = vector.extract_strided_slice %23 {offsets = [0, 37], sizes = [4, 286], strides = [1, 1]} : vector<4x384xbf16> to vector<4x286xbf16>
    %cst_35 = arith.constant dense<0.000000e+00> : vector<32x286xf32>
    %45 = tpu.matmul %19, %44, %cst_35 {dimension_numbers = #tpu.dot_dimension_numbers<[1], [0], [0], [1], [0, 0, 1, 1], [], []>} : vector<32x4xbf16>, vector<4x286xbf16>, vector<32x286xf32> -> vector<32x286xf32>
    %46 = arith.addf %43, %45 : vector<32x286xf32>
    %47 = vector.extract_strided_slice %23 {offsets = [0, 38], sizes = [4, 286], strides = [1, 1]} : vector<4x384xbf16> to vector<4x286xbf16>
    %cst_36 = arith.constant dense<0.000000e+00> : vector<32x286xf32>
    %48 = tpu.matmul %21, %47, %cst_36 {dimension_numbers = #tpu.dot_dimension_numbers<[1], [0], [0], [1], [0, 0, 1, 1], [], []>} : vector<32x4xbf16>, vector<4x286xbf16>, vector<32x286xf32> -> vector<32x286xf32>
    %49 = arith.addf %46, %48 : vector<32x286xf32>
    %50 = vector.broadcast %0 : vector<32x1xf32> to vector<32x286xf32>
    %51 = arith.addf %49, %50 : vector<32x286xf32>
    %cst_37 = arith.constant 0.000000e+00 : f32
    %52 = vector.broadcast %cst_37 : f32 to vector<32x286xf32>
    %53 = arith.maximumf %51, %52 : vector<32x286xf32>
    %54 = vector.broadcast %1 : vector<1x286xf32> to vector<32x286xf32>
    %55 = arith.mulf %53, %54 : vector<32x286xf32>
    %cst_38 = arith.constant dense<0.000000e+00> : vector<32xf32>
    %56 = vector.multi_reduction <add>, %55, %cst_38 [1] : vector<32x286xf32> to vector<32xf32>
    %57 = vector.shape_cast %56 : vector<32xf32> to vector<32x1xf32>
    %cst_39 = arith.constant dense<0.000000e+00> : vector<2x1xf32>
    %58 = tpu.matmul %2, %57, %cst_39 {dimension_numbers = #tpu.dot_dimension_numbers<[1], [0], [0], [1], [0, 0, 1, 1], [], []>} : vector<2x32xf32>, vector<32x1xf32>, vector<2x1xf32> -> vector<2x1xf32>
    %59 = arith.addf %58, %3 : vector<2x1xf32>
    %60 = arith.negf %59 : vector<2x1xf32>
    %61 = math.exp %60 : vector<2x1xf32>
    %cst_40 = arith.constant 1.000000e+00 : f32
    %62 = vector.broadcast %cst_40 : f32 to vector<2x1xf32>
    %63 = arith.addf %62, %61 : vector<2x1xf32>
    %64 = arith.divf %62, %63 : vector<2x1xf32>
    %c0_41 = arith.constant 0 : index
    %c0_42 = arith.constant 0 : index
    %c0_43 = arith.constant 0 : index
    %65 = vector.load %arg7[%c0_41, %c0_42, %c0_43] : memref<1x2x1xf32, #tpu.memory_space<vmem>>, vector<1x2x1xf32>
    %66 = vector.shape_cast %65 : vector<1x2x1xf32> to vector<2x1xf32>
    %67 = vector.shape_cast %64 : vector<2x1xf32> to vector<1x2x1xf32>
    tpu.vector_store %arg7[%c0_41, %c0_42, %c0_43], %67 {strides = array<i32>} : memref<1x2x1xf32, #tpu.memory_space<vmem>>, vector<1x2x1xf32>,
    return
  }
  func.func @transform_0(%arg0: i32) -> (i32, i32, i32) {
    %c0_i32 = arith.constant 0 : i32
    %c0_i32_0 = arith.constant 0 : i32
    %c0_i32_1 = arith.constant 0 : i32
    return %arg0, %c0_i32, %c0_i32_0 : i32, i32, i32
  }
  func.func @transform_1(%arg0: i32) -> (i32, i32, i32) {
    %c0_i32 = arith.constant 0 : i32
    %c0_i32_0 = arith.constant 0 : i32
    %c0_i32_1 = arith.constant 0 : i32
    %c0_i32_2 = arith.constant 0 : i32
    return %c0_i32, %c0_i32_0, %c0_i32_1 : i32, i32, i32
  }
  func.func @transform_2(%arg0: i32) -> (i32, i32) {
    %c0_i32 = arith.constant 0 : i32
    %c0_i32_0 = arith.constant 0 : i32
    %c0_i32_1 = arith.constant 0 : i32
    return %c0_i32, %c0_i32_0 : i32, i32
  }
  func.func @transform_3(%arg0: i32) -> (i32, i32) {
    %c0_i32 = arith.constant 0 : i32
    %c0_i32_0 = arith.constant 0 : i32
    %c0_i32_1 = arith.constant 0 : i32
    return %c0_i32, %c0_i32_0 : i32, i32
  }
  func.func @transform_4(%arg0: i32) -> (i32, i32) {
    %c0_i32 = arith.constant 0 : i32
    %c0_i32_0 = arith.constant 0 : i32
    %c0_i32_1 = arith.constant 0 : i32
    return %c0_i32, %c0_i32_0 : i32, i32
  }
  func.func @transform_5(%arg0: i32) -> (i32, i32) {
    %c0_i32 = arith.constant 0 : i32
    %c0_i32_0 = arith.constant 0 : i32
    %c0_i32_1 = arith.constant 0 : i32
    return %c0_i32, %c0_i32_0 : i32, i32
  }
  func.func @transform_6(%arg0: i32) -> (i32, i32, i32) {
    %c0_i32 = arith.constant 0 : i32
    %c0_i32_0 = arith.constant 0 : i32
    %c0_i32_1 = arith.constant 0 : i32
    return %arg0, %c0_i32, %c0_i32_0 : i32, i32, i32
  }
}

</mosaic_0001>

<llo_original>
// kernel: model_forward.1
$region0: #{model_forward.1}
  #allocation0 [shape = 'u32[]', space=smem, size = 0x4, offset = 0x4, fixed_abs, tag = 'smem constant byte address 0x4 - core index']
  #allocation1 [shape = 'u32[72,128]{1,0:T(1,128)}', space=vmem, size = 0x9000, scoped, tag = 'internal scratch']
  %s0 = inlined_call_operand.vmem [shape: bf16[2,4,384], index: 0, kind: input, shape index: {}]
  %s1 = inlined_call_operand.vmem [shape: bf16[9,32,4], index: 1, kind: input, shape index: {}]
  %s2 = inlined_call_operand.vmem [shape: f32[32,1], index: 2, kind: input, shape index: {}]
  %s3 = inlined_call_operand.vmem [shape: f32[1,286], index: 3, kind: input, shape index: {}]
  %s4 = inlined_call_operand.vmem [shape: f32[2,32], index: 4, kind: input, shape index: {}]
  %s5 = inlined_call_operand.vmem [shape: f32[2,1], index: 5, kind: input, shape index: {}]
  %s6 = inlined_call_operand.vmem [shape: f32[2,2,1], index: 6, kind: output, shape index: {}]
  %s7 = sld [smem:[#allocation0]]
  $region57: #{model_forward.1} parent=0
    _
  %s9 = ssub.s32 1, %s7
  %s10 = scalar_select 0, %s9, %s7
  loop: start=0, step=1, limit=4
  $region2: #{model_forward.1} parent=0 // loop_pre_header
    _
  $region3: #{model_forward.1} parent=0 // loop_header
    %s12 = sphi 0, %s16
    %p13 = scmp.ge.s32.totalorder %s12, 4
    %s22 = sphi 0, %s24
    %s25 = sphi 0, %s22
    %s26 = sphi 0, %s25
    %s42 = sphi 0, %s26
    %s46 = sphi 0, %s46
    %s48 = sphi 0, %s46
    %s49 = sphi 0, %s48
    %s63 = sphi 0, %s49
    %s67 = sphi 0, %s67
    %s69 = sphi 0, %s67
    %s70 = sphi 0, %s69
    %s84 = sphi 0, %s70
    %s88 = sphi 0, %s88
    %s90 = sphi 0, %s88
    %s91 = sphi 0, %s90
    %s105 = sphi 0, %s91
    %s109 = sphi 0, %s109
    %s111 = sphi 0, %s109
    %s112 = sphi 0, %s111
    %s126 = sphi 0, %s112
    %s130 = sphi 0, %s130
    %s132 = sphi 0, %s130
    %s133 = sphi 0, %s132
    %s147 = sphi 0, %s133
    %s153 = sphi 0, %s155
    %s156 = sphi 0, %s153
    %s157 = sphi 0, %s156
    %s173 = sphi 0, %s157
  $region4: #{model_forward.1} parent=0 // loop_header_branch
    %15 = sbr.rel (%p13) target = $region8
  $region5: #{model_forward.1} parent=0 // loop_body
    %s17 = ssub.s32 %s12, 1
    %s18 = ssub.s32 %s12, 2
    %s19 = sadd.s32 %s12, 1
    %s20 = ssub.s32 %s12, %s19
    %p21 = scmp.eq.s32.totalorder %s20, 0
    %s23 = sadd.s32 %s22, 1
    %s24 = scalar_select %p21, %s22, %s23
    %p27 = pneg %p21
    %p28 = scmp.eq.s32.totalorder %s12, 1
    %p29 = por %p27, %p28
    %p30 = scmp.ne.s32.totalorder %s22, %s25
    %p31 = scmp.eq.s32.totalorder %s12, 0
    %p32 = por %p30, %p31
    %p33 = scmp.ne.s32.totalorder %s22, %s25
    %p34 = scmp.eq.s32.totalorder %s17, 1
    %p35 = por %p33, %p34
    %p36 = scmp.ne.s32.totalorder %s25, %s26
    %p37 = scmp.eq.s32.totalorder %s17, 0
    %p38 = por %p36, %p37
    %p39 = scmp.ne.s32.totalorder %s25, %s26
    %p40 = scmp.eq.s32.totalorder %s18, 1
    %p41 = por %p39, %p40
    %p43 = scmp.ne.s32.totalorder %s26, %s42
    %p44 = scmp.eq.s32.totalorder %s18, 0
    %p45 = por %p43, %p44
    %s47 = sadd.s32 %s46, 1
    %p50 = scmp.eq.s32.totalorder %s12, 1
    %p51 = scmp.ne.s32.totalorder %s46, %s48
    %p52 = scmp.eq.s32.totalorder %s12, 0
    %p53 = por %p51, %p52
    %p54 = scmp.ne.s32.totalorder %s46, %s48
    %p55 = scmp.eq.s32.totalorder %s17, 1
    %p56 = por %p54, %p55
    %p57 = scmp.ne.s32.totalorder %s48, %s49
    %p58 = scmp.eq.s32.totalorder %s17, 0
    %p59 = por %p57, %p58
    %p60 = scmp.ne.s32.totalorder %s48, %s49
    %p61 = scmp.eq.s32.totalorder %s18, 1
    %p62 = por %p60, %p61
    %p64 = scmp.ne.s32.totalorder %s49, %s63
    %p65 = scmp.eq.s32.totalorder %s18, 0
    %p66 = por %p64, %p65
    %s68 = sadd.s32 %s67, 1
    %p71 = scmp.eq.s32.totalorder %s12, 1
    %p72 = scmp.ne.s32.totalorder %s67, %s69
    %p73 = scmp.eq.s32.totalorder %s12, 0
    %p74 = por %p72, %p73
    %p75 = scmp.ne.s32.totalorder %s67, %s69
    %p76 = scmp.eq.s32.totalorder %s17, 1
    %p77 = por %p75, %p76
    %p78 = scmp.ne.s32.totalorder %s69, %s70
    %p79 = scmp.eq.s32.totalorder %s17, 0
    %p80 = por %p78, %p79
    %p81 = scmp.ne.s32.totalorder %s69, %s70
    %p82 = scmp.eq.s32.totalorder %s18, 1
    %p83 = por %p81, %p82
    %p85 = scmp.ne.s32.totalorder %s70, %s84
    %p86 = scmp.eq.s32.totalorder %s18, 0
    %p87 = por %p85, %p86
    %s89 = sadd.s32 %s88, 1
    %p92 = scmp.eq.s32.totalorder %s12, 1
    %p93 = scmp.ne.s32.totalorder %s88, %s90
    %p94 = scmp.eq.s32.totalorder %s12, 0
    %p95 = por %p93, %p94
    %p96 = scmp.ne.s32.totalorder %s88, %s90
    %p97 = scmp.eq.s32.totalorder %s17, 1
    %p98 = por %p96, %p97
    %p99 = scmp.ne.s32.totalorder %s90, %s91
    %p100 = scmp.eq.s32.totalorder %s17, 0
    %p101 = por %p99, %p100
    %p102 = scmp.ne.s32.totalorder %s90, %s91
    %p103 = scmp.eq.s32.totalorder %s18, 1
    %p104 = por %p102, %p103
    %p106 = scmp.ne.s32.totalorder %s91, %s105
    %p107 = scmp.eq.s32.totalorder %s18, 0
    %p108 = por %p106, %p107
    %s110 = sadd.s32 %s109, 1
    %p113 = scmp.eq.s32.totalorder %s12, 1
    %p114 = scmp.ne.s32.totalorder %s109, %s111
    %p115 = scmp.eq.s32.totalorder %s12, 0
    %p116 = por %p114, %p115
    %p117 = scmp.ne.s32.totalorder %s109, %s111
    %p118 = scmp.eq.s32.totalorder %s17, 1
    %p119 = por %p117, %p118
    %p120 = scmp.ne.s32.totalorder %s111, %s112
    %p121 = scmp.eq.s32.totalorder %s17, 0
    %p122 = por %p120, %p121
    %p123 = scmp.ne.s32.totalorder %s111, %s112
    %p124 = scmp.eq.s32.totalorder %s18, 1
    %p125 = por %p123, %p124
    %p127 = scmp.ne.s32.totalorder %s112, %s126
    %p128 = scmp.eq.s32.totalorder %s18, 0
    %p129 = por %p127, %p128
    %s131 = sadd.s32 %s130, 1
    %p134 = scmp.eq.s32.totalorder %s12, 1
    %p135 = scmp.ne.s32.totalorder %s130, %s132
    %p136 = scmp.eq.s32.totalorder %s12, 0
    %p137 = por %p135, %p136
    %p138 = scmp.ne.s32.totalorder %s130, %s132
    %p139 = scmp.eq.s32.totalorder %s17, 1
    %p140 = por %p138, %p139
    %p141 = scmp.ne.s32.totalorder %s132, %s133
    %p142 = scmp.eq.s32.totalorder %s17, 0
    %p143 = por %p141, %p142
    %p144 = scmp.ne.s32.totalorder %s132, %s133
    %p145 = scmp.eq.s32.totalorder %s18, 1
    %p146 = por %p144, %p145
    %p148 = scmp.ne.s32.totalorder %s133, %s147
    %p149 = scmp.eq.s32.totalorder %s18, 0
    %p150 = por %p148, %p149
    %s151 = ssub.s32 %s12, %s19
    %p152 = scmp.eq.s32.totalorder %s151, 0
    %s154 = sadd.s32 %s153, 1
    %s155 = scalar_select %p152, %s153, %s154
    %p158 = pneg %p152
    %p159 = scmp.eq.s32.totalorder %s12, 1
    %p160 = por %p158, %p159
    %p161 = scmp.ne.s32.totalorder %s153, %s156
    %p162 = scmp.eq.s32.totalorder %s12, 0
    %p163 = por %p161, %p162
    %p164 = scmp.ne.s32.totalorder %s153, %s156
    %p165 = scmp.eq.s32.totalorder %s17, 1
    %p166 = por %p164, %p165
    %p167 = scmp.ne.s32.totalorder %s156, %s157
    %p168 = scmp.eq.s32.totalorder %s17, 0
    %p169 = por %p167, %p168
    %p170 = scmp.ne.s32.totalorder %s156, %s157
    %p171 = scmp.eq.s32.totalorder %s18, 1
    %p172 = por %p170, %p171
    %p174 = scmp.ne.s32.totalorder %s157, %s173
    %p175 = scmp.eq.s32.totalorder %s18, 0
    %p176 = por %p174, %p175
    %p177 = scmp.le.s32.totalorder 1, %s12
    %p178 = scmp.lt.s32.totalorder %s12, 3
    %p179 = pnand %p177, %p178
    %p180 = pneg %p179
    // Predicated region
    $region9: #{model_forward.1} parent=5 // pred_check
      _
    $region10: #{model_forward.1} parent=5 // pred_check_branch
      %182 = sbr.rel (%p179) target = $region12
    $region11: #{model_forward.1} parent=5 // pred_region
      %s183 = ssub.s32 %s12, 1
      // Predicated region
      $region13: #{model_forward.1} parent=11 // pred_check
        %p184 = pneg %p59
      $region14: #{model_forward.1} parent=11 // pred_check_branch
        %186 = sbr.rel (%p184) target = $region16
      $region15: #{model_forward.1} parent=11 // pred_region
        _
      $region16: #{model_forward.1} parent=11 // pred_fallthru
        _
      // Predicated region
      $region17: #{model_forward.1} parent=11 // pred_check
        %p187 = pneg %p80
      $region18: #{model_forward.1} parent=11 // pred_check_branch
        %189 = sbr.rel (%p187) target = $region20
      $region19: #{model_forward.1} parent=11 // pred_region
        _
      $region20: #{model_forward.1} parent=11 // pred_fallthru
        _
      // Predicated region
      $region21: #{model_forward.1} parent=11 // pred_check
        %p190 = pneg %p101
      $region22: #{model_forward.1} parent=11 // pred_check_branch
        %192 = sbr.rel (%p190) target = $region24
      $region23: #{model_forward.1} parent=11 // pred_region
        _
      $region24: #{model_forward.1} parent=11 // pred_fallthru
        _
      // Predicated region
      $region25: #{model_forward.1} parent=11 // pred_check
        %p193 = pneg %p122
      $region26: #{model_forward.1} parent=11 // pred_check_branch
        %195 = sbr.rel (%p193) target = $region28
      $region27: #{model_forward.1} parent=11 // pred_region
        _
      $region28: #{model_forward.1} parent=11 // pred_fallthru
        _
      // Predicated region
      $region29: #{model_forward.1} parent=11 // pred_check
        %p196 = pneg %p143
      $region30: #{model_forward.1} parent=11 // pred_check_branch
        %198 = sbr.rel (%p196) target = $region32
      $region31: #{model_forward.1} parent=11 // pred_region
        _
      $region32: #{model_forward.1} parent=11 // pred_fallthru
        _
    $region12: #{model_forward.1} parent=5 // pred_fallthru
      _
    %p199 = scmp.lt.s32.totalorder %s12, 2
    // Predicated region
    $region33: #{model_forward.1} parent=5 // pred_check
      %p200 = pneg %p199
    $region34: #{model_forward.1} parent=5 // pred_check_branch
      %202 = sbr.rel (%p200) target = $region36
    $region35: #{model_forward.1} parent=5 // pred_region
      // Predicated region
      $region37: #{model_forward.1} parent=35 // pred_check
        %p203 = pneg %p32
      $region38: #{model_forward.1} parent=35 // pred_check_branch
        %205 = sbr.rel (%p203) target = $region40
      $region39: #{model_forward.1} parent=35 // pred_region
        %p206 = scmp.lt.s32.totalorder %s12, 1
        %s207 = scalar_select %p206, %s12, 1
        %s208 = smul.addr %s207, 3
        %s209 = smul.addr %s208, 2
        %s210 = scalar_lea.vmem %s0, %s209
      $region40: #{model_forward.1} parent=35 // pred_fallthru
        _
    $region36: #{model_forward.1} parent=5 // pred_fallthru
      _
    %p211 = scmp.le.s32.totalorder 1, %s12
    %p212 = scmp.lt.s32.totalorder %s12, 3
    %p213 = pnand %p211, %p212
    %p214 = pneg %p213
    // Predicated region
    $region41: #{model_forward.1} parent=5 // pred_check
      _
    $region42: #{model_forward.1} parent=5 // pred_check_branch
      %216 = sbr.rel (%p213) target = $region44
    $region43: #{model_forward.1} parent=5 // pred_region
      %s217 = ssub.s32 %s12, 1
      %p218 = scmp.lt.s32.totalorder %s17, 1
      %s219 = scalar_select %p218, %s17, 1
      %s220 = smul.addr %s219, 3
      %s221 = smul.addr %s220, 2
      %s222 = scalar_lea.vmem %s0, %s221
      %p223 = pneg %p38
      %p224 = pneg %p35
      %p225 = pneg %p59
      %p226 = pneg %p56
      %p227 = pneg %p80
      %p228 = pneg %p77
      %p229 = pneg %p101
      %p230 = pneg %p98
      %p231 = pneg %p122
      %p232 = pneg %p119
      %p233 = pneg %p143
      %p234 = pneg %p140
      %p235 = pneg %p169
      %p236 = pneg %p166
      %p237 = scmp.lt.s32.totalorder %s17, 1
      %s238 = scalar_select %p237, %s17, 1
      %s239 = smul.addr %s238, 2
      %s240 = scalar_lea.vmem %s6, %s239
      %p241 = scmp.lt.s32.totalorder %s17, 1
      %s242 = scalar_select %p241, %s17, 1
      %s243 = smul.addr %s242, 3
      %s244 = smul.addr %s243, 2
      %s245 = scalar_lea.vmem %s0, %s244
      %p246 = scmp.lt.s32.totalorder %s17, 1
      %s247 = scalar_select %p246, %s17, 1
      %s248 = smul.addr %s247, 2
      %s249 = scalar_lea.vmem %s6, %s248
      %v251 = vld [vmem:[%s2] sm:$0xff]
      %v252 = vld [vmem:[%s2 + $0x8] sm:$0xff]
      %v253 = vld [vmem:[%s2 + $0x10] sm:$0xff]
      %v254 = vld [vmem:[%s2 + $0x18] sm:$0xff]
      %v255 = vld [vmem:[%s3] sm:$0x7]
      %v256 = vld [vmem:[%s4] sm:$0x3]
      %v257 = vld [vmem:[%s5] sm:$0x3]
      %v258 = vld [vmem:[%s1] sm:$0xf]
      %v259 = vld [vmem:[%s1 + $0x4] sm:$0xf]
      %v260 = vld [vmem:[%s1 + $0x8] sm:$0xf]
      %v261 = vld [vmem:[%s1 + $0xc] sm:$0xf]
      %s262 = scalar_lea.vmem %s1, 16
      %v263 = vld [vmem:[%s262] sm:$0xf]
      %v264 = vld [vmem:[%s262 + $0x4] sm:$0xf]
      %v265 = vld [vmem:[%s262 + $0x8] sm:$0xf]
      %v266 = vld [vmem:[%s262 + $0xc] sm:$0xf]
      %s267 = scalar_lea.vmem %s1, 32
      %v268 = vld [vmem:[%s267] sm:$0xf]
      %v269 = vld [vmem:[%s267 + $0x4] sm:$0xf]
      %v270 = vld [vmem:[%s267 + $0x8] sm:$0xf]
      %v271 = vld [vmem:[%s267 + $0xc] sm:$0xf]
      %s272 = scalar_lea.vmem %s1, 48
      %v273 = vld [vmem:[%s272] sm:$0xf]
      %v274 = vld [vmem:[%s272 + $0x4] sm:$0xf]
      %v275 = vld [vmem:[%s272 + $0x8] sm:$0xf]
      %v276 = vld [vmem:[%s272 + $0xc] sm:$0xf]
      %s277 = scalar_lea.vmem %s1, 64
      %v278 = vld [vmem:[%s277] sm:$0xf]
      %v279 = vld [vmem:[%s277 + $0x4] sm:$0xf]
      %v280 = vld [vmem:[%s277 + $0x8] sm:$0xf]
      %v281 = vld [vmem:[%s277 + $0xc] sm:$0xf]
      %s282 = scalar_lea.vmem %s1, 80
      %v283 = vld [vmem:[%s282] sm:$0xf]
      %v284 = vld [vmem:[%s282 + $0x4] sm:$0xf]
      %v285 = vld [vmem:[%s282 + $0x8] sm:$0xf]
      %v286 = vld [vmem:[%s282 + $0xc] sm:$0xf]
      %s287 = scalar_lea.vmem %s1, 96
      %v288 = vld [vmem:[%s287] sm:$0xf]
      %v289 = vld [vmem:[%s287 + $0x4] sm:$0xf]
      %v290 = vld [vmem:[%s287 + $0x8] sm:$0xf]
      %v291 = vld [vmem:[%s287 + $0xc] sm:$0xf]
      %s292 = scalar_lea.vmem %s1, 112
      %v293 = vld [vmem:[%s292] sm:$0xf]
      %v294 = vld [vmem:[%s292 + $0x4] sm:$0xf]
      %v295 = vld [vmem:[%s292 + $0x8] sm:$0xf]
      %v296 = vld [vmem:[%s292 + $0xc] sm:$0xf]
      %s297 = scalar_lea.vmem %s1, 128
      %v298 = vld [vmem:[%s297] sm:$0xf]
      %v299 = vld [vmem:[%s297 + $0x4] sm:$0xf]
      %v300 = vld [vmem:[%s297 + $0x8] sm:$0xf]
      %v301 = vld [vmem:[%s297 + $0xc] sm:$0xf]
      %v302 = vld [vmem:[%s245] sm:$0x3f]
      %v307 = vunpack.c.l.b16 %v263
      %v308 = vunpack.c.l.b16 %v264
      %v309 = vunpack.c.l.b16 %v265
      %v310 = vunpack.c.l.b16 %v266
      %v311 = vpack.c.b16 %v308, %v307
      %v312 = vpack.c.b16 %v310, %v309
      %314 = vst [vmem:[#allocation1] ss:$4 sm:$0xff] %v302
      %v315 = vld.sshfl [vmem:[#allocation1] sm:$0xff pattern:$0x73625140]
      %v317 = vld.sshfl [vmem:[#allocation1 + $0x8] sm:$0xff pattern:$0x73625140]
      %v319 = vld.sshfl [vmem:[#allocation1 + $0x10] sm:$0xff pattern:$0x73625140]
      %321 = vrot.lane.b32.xlu0 %v315, 127
      %v322 = vpop.permute.xlu0 %321
      %323 = vrot.lane.b32.xlu0 %v317, 127
      %v324 = vpop.permute.xlu0 %323
      %325 = vrot.lane.b32.xlu0 %v319, 127
      %v326 = vpop.permute.xlu0 %325
      %vm327 = vcmask 1039360
      %v328 = vsel %vm327, %v322, %v324
      %v329 = vsel %vm327, %v324, %v326
      %vm330 = vcmask 31744
      %v332 = vsel %vm330, %v311, 0
      %v335 = vsel %vm330, %v312, 0
      %vm337 = vcmask 1041408
      %v339 = vsel %vm337, %v328, 0
      %v342 = vsel %vm337, %v329, 0
      %v345 = vsel %vm337, %v326, 0
      %347 = vmatpush.bf16.msra.mxu0 0
      %348 = vmatpush.bf16.msra.mxu0 0
      %349 = vmatpush.bf16.msra.mxu0 0
      %350 = vmatpush.bf16.msra.mxu0 0
      %351 = vmatpush.bf16.msra.mxu0 0
      %352 = vmatpush.bf16.msra.mxu0 0
      %353 = vmatpush.bf16.msra.mxu0 0
      %354 = vmatpush.bf16.msra.mxu0 %v339
      %355 = vmatmul.bf16.gmra.mxu0 %v332
      %v356 = vpop.f32.mrf.mxu0
      %v357 = vadd.f32 0.0, %v356
      %v358 = vpop.f32.mrf.mxu0
      %v359 = vadd.f32 0.0, %v358
      %360 = vmatmul.bf16.gmra.mxu0 %v335
      %v361 = vpop.f32.mrf.mxu0
      %v362 = vadd.f32 0.0, %v361
      %v363 = vpop.f32.mrf.mxu0
      %v364 = vadd.f32 0.0, %v363
      %365 = vdwg.mxu0
      %366 = vmatpush.bf16.msra.mxu0 0
      %367 = vmatpush.bf16.msra.mxu0 0
      %368 = vmatpush.bf16.msra.mxu0 0
      %369 = vmatpush.bf16.msra.mxu0 0
      %370 = vmatpush.bf16.msra.mxu0 0
      %371 = vmatpush.bf16.msra.mxu0 0
      %372 = vmatpush.bf16.msra.mxu0 0
      %373 = vmatpush.bf16.msra.mxu0 %v342
      %374 = vmatmul.bf16.gmra.mxu0 %v332
      %v375 = vpop.f32.mrf.mxu0
      %v376 = vadd.f32 0.0, %v375
      %v377 = vpop.f32.mrf.mxu0
      %v378 = vadd.f32 0.0, %v377
      %379 = vmatmul.bf16.gmra.mxu0 %v335
      %v380 = vpop.f32.mrf.mxu0
      %v381 = vadd.f32 0.0, %v380
      %v382 = vpop.f32.mrf.mxu0
      %v383 = vadd.f32 0.0, %v382
      %384 = vdwg.mxu0
      %385 = vmatpush.bf16.msra.mxu0 0
      %386 = vmatpush.bf16.msra.mxu0 0
      %387 = vmatpush.bf16.msra.mxu0 0
      %388 = vmatpush.bf16.msra.mxu0 0
      %389 = vmatpush.bf16.msra.mxu0 0
      %390 = vmatpush.bf16.msra.mxu0 0
      %391 = vmatpush.bf16.msra.mxu0 0
      %392 = vmatpush.bf16.msra.mxu0 %v345
      %393 = vmatmul.bf16.gmra.mxu0 %v332
      %v394 = vpop.f32.mrf.mxu0
      %v395 = vadd.f32 0.0, %v394
      %v396 = vpop.f32.mrf.mxu0
      %v397 = vadd.f32 0.0, %v396
      %398 = vmatmul.bf16.gmra.mxu0 %v335
      %v399 = vpop.f32.mrf.mxu0
      %v400 = vadd.f32 0.0, %v399
      %v401 = vpop.f32.mrf.mxu0
      %v402 = vadd.f32 0.0, %v401
      %403 = vdwg.mxu0
      %v408 = vunpack.c.l.b16 %v258
      %v409 = vunpack.c.l.b16 %v259
      %v410 = vunpack.c.l.b16 %v260
      %v411 = vunpack.c.l.b16 %v261
      %v412 = vpack.c.b16 %v409, %v408
      %v413 = vpack.c.b16 %v411, %v410
      %414 = vst [vmem:[#allocation1] ss:$4 sm:$0xff] %v302
      %v415 = vld.sshfl [vmem:[#allocation1] sm:$0xff pattern:$0x73625140]
      %v416 = vld.sshfl [vmem:[#allocation1 + $0x8] sm:$0xff pattern:$0x73625140]
      %v417 = vld.sshfl [vmem:[#allocation1 + $0x10] sm:$0xff pattern:$0x73625140]
      %v419 = vsel %vm330, %v412, 0
      %v422 = vsel %vm330, %v413, 0
      %v424 = vsel %vm337, %v415, 0
      %v426 = vsel %vm337, %v416, 0
      %v428 = vsel %vm337, %v417, 0
      %430 = vmatpush.bf16.msra.mxu0 0
      %431 = vmatpush.bf16.msra.mxu0 0
      %432 = vmatpush.bf16.msra.mxu0 0
      %433 = vmatpush.bf16.msra.mxu0 0
      %434 = vmatpush.bf16.msra.mxu0 0
      %435 = vmatpush.bf16.msra.mxu0 0
      %436 = vmatpush.bf16.msra.mxu0 0
      %437 = vmatpush.bf16.msra.mxu0 %v424
      %438 = vmatmul.bf16.gmra.mxu0 %v419
      %v439 = vpop.f32.mrf.mxu0
      %v440 = vadd.f32 %v357, %v439
      %v441 = vpop.f32.mrf.mxu0
      %v442 = vadd.f32 %v359, %v441
      %443 = vmatmul.bf16.gmra.mxu0 %v422
      %v444 = vpop.f32.mrf.mxu0
      %v445 = vadd.f32 %v362, %v444
      %v446 = vpop.f32.mrf.mxu0
      %v447 = vadd.f32 %v364, %v446
      %448 = vdwg.mxu0
      %449 = vmatpush.bf16.msra.mxu0 0
      %450 = vmatpush.bf16.msra.mxu0 0
      %451 = vmatpush.bf16.msra.mxu0 0
      %452 = vmatpush.bf16.msra.mxu0 0
      %453 = vmatpush.bf16.msra.mxu0 0
      %454 = vmatpush.bf16.msra.mxu0 0
      %455 = vmatpush.bf16.msra.mxu0 0
      %456 = vmatpush.bf16.msra.mxu0 %v426
      %457 = vmatmul.bf16.gmra.mxu0 %v419
      %v458 = vpop.f32.mrf.mxu0
      %v459 = vadd.f32 %v376, %v458
      %v460 = vpop.f32.mrf.mxu0
      %v461 = vadd.f32 %v378, %v460
      %462 = vmatmul.bf16.gmra.mxu0 %v422
      %v463 = vpop.f32.mrf.mxu0
      %v464 = vadd.f32 %v381, %v463
      %v465 = vpop.f32.mrf.mxu0
      %v466 = vadd.f32 %v383, %v465
      %467 = vdwg.mxu0
      %468 = vmatpush.bf16.msra.mxu0 0
      %469 = vmatpush.bf16.msra.mxu0 0
      %470 = vmatpush.bf16.msra.mxu0 0
      %471 = vmatpush.bf16.msra.mxu0 0
      %472 = vmatpush.bf16.msra.mxu0 0
      %473 = vmatpush.bf16.msra.mxu0 0
      %474 = vmatpush.bf16.msra.mxu0 0
      %475 = vmatpush.bf16.msra.mxu0 %v428
      %476 = vmatmul.bf16.gmra.mxu0 %v419
      %v477 = vpop.f32.mrf.mxu0
      %v478 = vadd.f32 %v395, %v477
      %v479 = vpop.f32.mrf.mxu0
      %v480 = vadd.f32 %v397, %v479
      %481 = vmatmul.bf16.gmra.mxu0 %v422
      %v482 = vpop.f32.mrf.mxu0
      %v483 = vadd.f32 %v400, %v482
      %v484 = vpop.f32.mrf.mxu0
      %v485 = vadd.f32 %v402, %v484
      %486 = vdwg.mxu0
      %v491 = vunpack.c.l.b16 %v268
      %v492 = vunpack.c.l.b16 %v269
      %v493 = vunpack.c.l.b16 %v270
      %v494 = vunpack.c.l.b16 %v271
      %v495 = vpack.c.b16 %v492, %v491
      %v496 = vpack.c.b16 %v494, %v493
      %497 = vst [vmem:[#allocation1] ss:$4 sm:$0xff] %v302
      %v498 = vld.sshfl [vmem:[#allocation1] sm:$0xff pattern:$0x73625140]
      %v500 = vld.sshfl [vmem:[#allocation1 + $0x8] sm:$0xff pattern:$0x73625140]
      %v502 = vld.sshfl [vmem:[#allocation1 + $0x10] sm:$0xff pattern:$0x73625140]
      %504 = vrot.lane.b32.xlu0 %v498, 126
      %v505 = vpop.permute.xlu0 %504
      %506 = vrot.lane.b32.xlu0 %v500, 126
      %v507 = vpop.permute.xlu0 %506
      %508 = vrot.lane.b32.xlu0 %v502, 126
      %v509 = vpop.permute.xlu0 %508
      %vm510 = vcmask 1031168
      %v511 = vsel %vm510, %v505, %v507
      %v512 = vsel %vm510, %v507, %v509
      %v514 = vsel %vm330, %v495, 0
      %v517 = vsel %vm330, %v496, 0
      %v520 = vsel %vm337, %v511, 0
      %v523 = vsel %vm337, %v512, 0
      %v526 = vsel %vm337, %v509, 0
      %528 = vmatpush.bf16.msra.mxu0 0
      %529 = vmatpush.bf16.msra.mxu0 0
      %530 = vmatpush.bf16.msra.mxu0 0
      %531 = vmatpush.bf16.msra.mxu0 0
      %532 = vmatpush.bf16.msra.mxu0 0
      %533 = vmatpush.bf16.msra.mxu0 0
      %534 = vmatpush.bf16.msra.mxu0 0
      %535 = vmatpush.bf16.msra.mxu0 %v520
      %536 = vmatmul.bf16.gmra.mxu0 %v514
      %v537 = vpop.f32.mrf.mxu0
      %v538 = vadd.f32 0.0, %v537
      %v539 = vpop.f32.mrf.mxu0
      %v540 = vadd.f32 0.0, %v539
      %541 = vmatmul.bf16.gmra.mxu0 %v517
      %v542 = vpop.f32.mrf.mxu0
      %v543 = vadd.f32 0.0, %v542
      %v544 = vpop.f32.mrf.mxu0
      %v545 = vadd.f32 0.0, %v544
      %546 = vdwg.mxu0
      %547 = vmatpush.bf16.msra.mxu0 0
      %548 = vmatpush.bf16.msra.mxu0 0
      %549 = vmatpush.bf16.msra.mxu0 0
      %550 = vmatpush.bf16.msra.mxu0 0
      %551 = vmatpush.bf16.msra.mxu0 0
      %552 = vmatpush.bf16.msra.mxu0 0
      %553 = vmatpush.bf16.msra.mxu0 0
      %554 = vmatpush.bf16.msra.mxu0 %v523
      %555 = vmatmul.bf16.gmra.mxu0 %v514
      %v556 = vpop.f32.mrf.mxu0
      %v557 = vadd.f32 0.0, %v556
      %v558 = vpop.f32.mrf.mxu0
      %v559 = vadd.f32 0.0, %v558
      %560 = vmatmul.bf16.gmra.mxu0 %v517
      %v561 = vpop.f32.mrf.mxu0
      %v562 = vadd.f32 0.0, %v561
      %v563 = vpop.f32.mrf.mxu0
      %v564 = vadd.f32 0.0, %v563
      %565 = vdwg.mxu0
      %566 = vmatpush.bf16.msra.mxu0 0
      %567 = vmatpush.bf16.msra.mxu0 0
      %568 = vmatpush.bf16.msra.mxu0 0
      %569 = vmatpush.bf16.msra.mxu0 0
      %570 = vmatpush.bf16.msra.mxu0 0
      %571 = vmatpush.bf16.msra.mxu0 0
      %572 = vmatpush.bf16.msra.mxu0 0
      %573 = vmatpush.bf16.msra.mxu0 %v526
      %574 = vmatmul.bf16.gmra.mxu0 %v514
      %v575 = vpop.f32.mrf.mxu0
      %v576 = vadd.f32 0.0, %v575
      %v577 = vpop.f32.mrf.mxu0
      %v578 = vadd.f32 0.0, %v577
      %579 = vmatmul.bf16.gmra.mxu0 %v517
      %v580 = vpop.f32.mrf.mxu0
      %v581 = vadd.f32 0.0, %v580
      %v582 = vpop.f32.mrf.mxu0
      %v583 = vadd.f32 0.0, %v582
      %584 = vdwg.mxu0
      %v585 = vadd.f32 %v440, %v538
      %v586 = vadd.f32 %v459, %v557
      %v587 = vadd.f32 %v478, %v576
      %v588 = vadd.f32 %v442, %v540
      %v589 = vadd.f32 %v461, %v559
      %v590 = vadd.f32 %v480, %v578
      %v591 = vadd.f32 %v445, %v543
      %v592 = vadd.f32 %v464, %v562
      %v593 = vadd.f32 %v483, %v581
      %v594 = vadd.f32 %v447, %v545
      %v595 = vadd.f32 %v466, %v564
      %v596 = vadd.f32 %v485, %v583
      %v601 = vunpack.c.l.b16 %v273
      %v602 = vunpack.c.l.b16 %v274
      %v603 = vunpack.c.l.b16 %v275
      %v604 = vunpack.c.l.b16 %v276
      %v605 = vpack.c.b16 %v602, %v601
      %v606 = vpack.c.b16 %v604, %v603
      %607 = vst [vmem:[#allocation1] ss:$4 sm:$0xff] %v302
      %v608 = vld.sshfl [vmem:[#allocation1] sm:$0xff pattern:$0x73625140]
      %v610 = vld.sshfl [vmem:[#allocation1 + $0x8] sm:$0xff pattern:$0x73625140]
      %v612 = vld.sshfl [vmem:[#allocation1 + $0x10] sm:$0xff pattern:$0x73625140]
      %614 = vrot.lane.b32.xlu0 %v608, 110
      %v615 = vpop.permute.xlu0 %614
      %616 = vrot.lane.b32.xlu0 %v610, 110
      %v617 = vpop.permute.xlu0 %616
      %618 = vrot.lane.b32.xlu0 %v612, 110
      %v619 = vpop.permute.xlu0 %618
      %vm620 = vcmask 900096
      %v621 = vsel %vm620, %v615, %v617
      %v622 = vsel %vm620, %v617, %v619
      %v624 = vsel %vm330, %v605, 0
      %v627 = vsel %vm330, %v606, 0
      %v630 = vsel %vm337, %v621, 0
      %v633 = vsel %vm337, %v622, 0
      %v636 = vsel %vm337, %v619, 0
      %638 = vmatpush.bf16.msra.mxu0 0
      %639 = vmatpush.bf16.msra.mxu0 0
      %640 = vmatpush.bf16.msra.mxu0 0
      %641 = vmatpush.bf16.msra.mxu0 0
      %642 = vmatpush.bf16.msra.mxu0 0
      %643 = vmatpush.bf16.msra.mxu0 0
      %644 = vmatpush.bf16.msra.mxu0 0
      %645 = vmatpush.bf16.msra.mxu0 %v630
      %646 = vmatmul.bf16.gmra.mxu0 %v624
      %v647 = vpop.f32.mrf.mxu0
      %v648 = vadd.f32 0.0, %v647
      %v649 = vpop.f32.mrf.mxu0
      %v650 = vadd.f32 0.0, %v649
      %651 = vmatmul.bf16.gmra.mxu0 %v627
      %v652 = vpop.f32.mrf.mxu0
      %v653 = vadd.f32 0.0, %v652
      %v654 = vpop.f32.mrf.mxu0
      %v655 = vadd.f32 0.0, %v654
      %656 = vdwg.mxu0
      %657 = vmatpush.bf16.msra.mxu0 0
      %658 = vmatpush.bf16.msra.mxu0 0
      %659 = vmatpush.bf16.msra.mxu0 0
      %660 = vmatpush.bf16.msra.mxu0 0
      %661 = vmatpush.bf16.msra.mxu0 0
      %662 = vmatpush.bf16.msra.mxu0 0
      %663 = vmatpush.bf16.msra.mxu0 0
      %664 = vmatpush.bf16.msra.mxu0 %v633
      %665 = vmatmul.bf16.gmra.mxu0 %v624
      %v666 = vpop.f32.mrf.mxu0
      %v667 = vadd.f32 0.0, %v666
      %v668 = vpop.f32.mrf.mxu0
      %v669 = vadd.f32 0.0, %v668
      %670 = vmatmul.bf16.gmra.mxu0 %v627
      %v671 = vpop.f32.mrf.mxu0
      %v672 = vadd.f32 0.0, %v671
      %v673 = vpop.f32.mrf.mxu0
      %v674 = vadd.f32 0.0, %v673
      %675 = vdwg.mxu0
      %676 = vmatpush.bf16.msra.mxu0 0
      %677 = vmatpush.bf16.msra.mxu0 0
      %678 = vmatpush.bf16.msra.mxu0 0
      %679 = vmatpush.bf16.msra.mxu0 0
      %680 = vmatpush.bf16.msra.mxu0 0
      %681 = vmatpush.bf16.msra.mxu0 0
      %682 = vmatpush.bf16.msra.mxu0 0
      %683 = vmatpush.bf16.msra.mxu0 %v636
      %684 = vmatmul.bf16.gmra.mxu0 %v624
      %v685 = vpop.f32.mrf.mxu0
      %v686 = vadd.f32 0.0, %v685
      %v687 = vpop.f32.mrf.mxu0
      %v688 = vadd.f32 0.0, %v687
      %689 = vmatmul.bf16.gmra.mxu0 %v627
      %v690 = vpop.f32.mrf.mxu0
      %v691 = vadd.f32 0.0, %v690
      %v692 = vpop.f32.mrf.mxu0
      %v693 = vadd.f32 0.0, %v692
      %694 = vdwg.mxu0
      %v695 = vadd.f32 %v585, %v648
      %v696 = vadd.f32 %v586, %v667
      %v697 = vadd.f32 %v587, %v686
      %v698 = vadd.f32 %v588, %v650
      %v699 = vadd.f32 %v589, %v669
      %v700 = vadd.f32 %v590, %v688
      %v701 = vadd.f32 %v591, %v653
      %v702 = vadd.f32 %v592, %v672
      %v703 = vadd.f32 %v593, %v691
      %v704 = vadd.f32 %v594, %v655
      %v705 = vadd.f32 %v595, %v674
      %v706 = vadd.f32 %v596, %v693
      %v711 = vunpack.c.l.b16 %v278
      %v712 = vunpack.c.l.b16 %v279
      %v713 = vunpack.c.l.b16 %v280
      %v714 = vunpack.c.l.b16 %v281
      %v715 = vpack.c.b16 %v712, %v711
      %v716 = vpack.c.b16 %v714, %v713
      %717 = vst [vmem:[#allocation1] ss:$4 sm:$0xff] %v302
      %v718 = vld.sshfl [vmem:[#allocation1] sm:$0xff pattern:$0x73625140]
      %v720 = vld.sshfl [vmem:[#allocation1 + $0x8] sm:$0xff pattern:$0x73625140]
      %v722 = vld.sshfl [vmem:[#allocation1 + $0x10] sm:$0xff pattern:$0x73625140]
      %724 = vrot.lane.b32.xlu0 %v718, 109
      %v725 = vpop.permute.xlu0 %724
      %726 = vrot.lane.b32.xlu0 %v720, 109
      %v727 = vpop.permute.xlu0 %726
      %728 = vrot.lane.b32.xlu0 %v722, 109
      %v729 = vpop.permute.xlu0 %728
      %vm730 = vcmask 891904
      %v731 = vsel %vm730, %v725, %v727
      %v732 = vsel %vm730, %v727, %v729
      %v734 = vsel %vm330, %v715, 0
      %v737 = vsel %vm330, %v716, 0
      %v740 = vsel %vm337, %v731, 0
      %v743 = vsel %vm337, %v732, 0
      %v746 = vsel %vm337, %v729, 0
      %748 = vmatpush.bf16.msra.mxu0 0
      %749 = vmatpush.bf16.msra.mxu0 0
      %750 = vmatpush.bf16.msra.mxu0 0
      %751 = vmatpush.bf16.msra.mxu0 0
      %752 = vmatpush.bf16.msra.mxu0 0
      %753 = vmatpush.bf16.msra.mxu0 0
      %754 = vmatpush.bf16.msra.mxu0 0
      %755 = vmatpush.bf16.msra.mxu0 %v740
      %756 = vmatmul.bf16.gmra.mxu0 %v734
      %v757 = vpop.f32.mrf.mxu0
      %v758 = vadd.f32 0.0, %v757
      %v759 = vpop.f32.mrf.mxu0
      %v760 = vadd.f32 0.0, %v759
      %761 = vmatmul.bf16.gmra.mxu0 %v737
      %v762 = vpop.f32.mrf.mxu0
      %v763 = vadd.f32 0.0, %v762
      %v764 = vpop.f32.mrf.mxu0
      %v765 = vadd.f32 0.0, %v764
      %766 = vdwg.mxu0
      %767 = vmatpush.bf16.msra.mxu0 0
      %768 = vmatpush.bf16.msra.mxu0 0
      %769 = vmatpush.bf16.msra.mxu0 0
      %770 = vmatpush.bf16.msra.mxu0 0
      %771 = vmatpush.bf16.msra.mxu0 0
      %772 = vmatpush.bf16.msra.mxu0 0
      %773 = vmatpush.bf16.msra.mxu0 0
      %774 = vmatpush.bf16.msra.mxu0 %v743
      %775 = vmatmul.bf16.gmra.mxu0 %v734
      %v776 = vpop.f32.mrf.mxu0
      %v777 = vadd.f32 0.0, %v776
      %v778 = vpop.f32.mrf.mxu0
      %v779 = vadd.f32 0.0, %v778
      %780 = vmatmul.bf16.gmra.mxu0 %v737
      %v781 = vpop.f32.mrf.mxu0
      %v782 = vadd.f32 0.0, %v781
      %v783 = vpop.f32.mrf.mxu0
      %v784 = vadd.f32 0.0, %v783
      %785 = vdwg.mxu0
      %786 = vmatpush.bf16.msra.mxu0 0
      %787 = vmatpush.bf16.msra.mxu0 0
      %788 = vmatpush.bf16.msra.mxu0 0
      %789 = vmatpush.bf16.msra.mxu0 0
      %790 = vmatpush.bf16.msra.mxu0 0
      %791 = vmatpush.bf16.msra.mxu0 0
      %792 = vmatpush.bf16.msra.mxu0 0
      %793 = vmatpush.bf16.msra.mxu0 %v746
      %794 = vmatmul.bf16.gmra.mxu0 %v734
      %v795 = vpop.f32.mrf.mxu0
      %v796 = vadd.f32 0.0, %v795
      %v797 = vpop.f32.mrf.mxu0
      %v798 = vadd.f32 0.0, %v797
      %799 = vmatmul.bf16.gmra.mxu0 %v737
      %v800 = vpop.f32.mrf.mxu0
      %v801 = vadd.f32 0.0, %v800
      %v802 = vpop.f32.mrf.mxu0
      %v803 = vadd.f32 0.0, %v802
      %804 = vdwg.mxu0
      %v805 = vadd.f32 %v695, %v758
      %v806 = vadd.f32 %v696, %v777
      %v807 = vadd.f32 %v697, %v796
      %v808 = vadd.f32 %v698, %v760
      %v809 = vadd.f32 %v699, %v779
      %v810 = vadd.f32 %v700, %v798
      %v811 = vadd.f32 %v701, %v763
      %v812 = vadd.f32 %v702, %v782
      %v813 = vadd.f32 %v703, %v801
      %v814 = vadd.f32 %v704, %v765
      %v815 = vadd.f32 %v705, %v784
      %v816 = vadd.f32 %v706, %v803
      %v821 = vunpack.c.l.b16 %v283
      %v822 = vunpack.c.l.b16 %v284
      %v823 = vunpack.c.l.b16 %v285
      %v824 = vunpack.c.l.b16 %v286
      %v825 = vpack.c.b16 %v822, %v821
      %v826 = vpack.c.b16 %v824, %v823
      %827 = vst [vmem:[#allocation1] ss:$4 sm:$0xff] %v302
      %v828 = vld.sshfl [vmem:[#allocation1] sm:$0xff pattern:$0x73625140]
      %v830 = vld.sshfl [vmem:[#allocation1 + $0x8] sm:$0xff pattern:$0x73625140]
      %v832 = vld.sshfl [vmem:[#allocation1 + $0x10] sm:$0xff pattern:$0x73625140]
      %834 = vrot.lane.b32.xlu0 %v828, 108
      %v835 = vpop.permute.xlu0 %834
      %836 = vrot.lane.b32.xlu0 %v830, 108
      %v837 = vpop.permute.xlu0 %836
      %838 = vrot.lane.b32.xlu0 %v832, 108
      %v839 = vpop.permute.xlu0 %838
      %vm840 = vcmask 883712
      %v841 = vsel %vm840, %v835, %v837
      %v842 = vsel %vm840, %v837, %v839
      %v844 = vsel %vm330, %v825, 0
      %v847 = vsel %vm330, %v826, 0
      %v850 = vsel %vm337, %v841, 0
      %v853 = vsel %vm337, %v842, 0
      %v856 = vsel %vm337, %v839, 0
      %858 = vmatpush.bf16.msra.mxu0 0
      %859 = vmatpush.bf16.msra.mxu0 0
      %860 = vmatpush.bf16.msra.mxu0 0
      %861 = vmatpush.bf16.msra.mxu0 0
      %862 = vmatpush.bf16.msra.mxu0 0
      %863 = vmatpush.bf16.msra.mxu0 0
      %864 = vmatpush.bf16.msra.mxu0 0
      %865 = vmatpush.bf16.msra.mxu0 %v850
      %866 = vmatmul.bf16.gmra.mxu0 %v844
      %v867 = vpop.f32.mrf.mxu0
      %v868 = vadd.f32 0.0, %v867
      %v869 = vpop.f32.mrf.mxu0
      %v870 = vadd.f32 0.0, %v869
      %871 = vmatmul.bf16.gmra.mxu0 %v847
      %v872 = vpop.f32.mrf.mxu0
      %v873 = vadd.f32 0.0, %v872
      %v874 = vpop.f32.mrf.mxu0
      %v875 = vadd.f32 0.0, %v874
      %876 = vdwg.mxu0
      %877 = vmatpush.bf16.msra.mxu0 0
      %878 = vmatpush.bf16.msra.mxu0 0
      %879 = vmatpush.bf16.msra.mxu0 0
      %880 = vmatpush.bf16.msra.mxu0 0
      %881 = vmatpush.bf16.msra.mxu0 0
      %882 = vmatpush.bf16.msra.mxu0 0
      %883 = vmatpush.bf16.msra.mxu0 0
      %884 = vmatpush.bf16.msra.mxu0 %v853
      %885 = vmatmul.bf16.gmra.mxu0 %v844
      %v886 = vpop.f32.mrf.mxu0
      %v887 = vadd.f32 0.0, %v886
      %v888 = vpop.f32.mrf.mxu0
      %v889 = vadd.f32 0.0, %v888
      %890 = vmatmul.bf16.gmra.mxu0 %v847
      %v891 = vpop.f32.mrf.mxu0
      %v892 = vadd.f32 0.0, %v891
      %v893 = vpop.f32.mrf.mxu0
      %v894 = vadd.f32 0.0, %v893
      %895 = vdwg.mxu0
      %896 = vmatpush.bf16.msra.mxu0 0
      %897 = vmatpush.bf16.msra.mxu0 0
      %898 = vmatpush.bf16.msra.mxu0 0
      %899 = vmatpush.bf16.msra.mxu0 0
      %900 = vmatpush.bf16.msra.mxu0 0
      %901 = vmatpush.bf16.msra.mxu0 0
      %902 = vmatpush.bf16.msra.mxu0 0
      %903 = vmatpush.bf16.msra.mxu0 %v856
      %904 = vmatmul.bf16.gmra.mxu0 %v844
      %v905 = vpop.f32.mrf.mxu0
      %v906 = vadd.f32 0.0, %v905
      %v907 = vpop.f32.mrf.mxu0
      %v908 = vadd.f32 0.0, %v907
      %909 = vmatmul.bf16.gmra.mxu0 %v847
      %v910 = vpop.f32.mrf.mxu0
      %v911 = vadd.f32 0.0, %v910
      %v912 = vpop.f32.mrf.mxu0
      %v913 = vadd.f32 0.0, %v912
      %914 = vdwg.mxu0
      %v915 = vadd.f32 %v805, %v868
      %v916 = vadd.f32 %v806, %v887
      %v917 = vadd.f32 %v807, %v906
      %v918 = vadd.f32 %v808, %v870
      %v919 = vadd.f32 %v809, %v889
      %v920 = vadd.f32 %v810, %v908
      %v921 = vadd.f32 %v811, %v873
      %v922 = vadd.f32 %v812, %v892
      %v923 = vadd.f32 %v813, %v911
      %v924 = vadd.f32 %v814, %v875
      %v925 = vadd.f32 %v815, %v894
      %v926 = vadd.f32 %v816, %v913
      %v931 = vunpack.c.l.b16 %v288
      %v932 = vunpack.c.l.b16 %v289
      %v933 = vunpack.c.l.b16 %v290
      %v934 = vunpack.c.l.b16 %v291
      %v935 = vpack.c.b16 %v932, %v931
      %v936 = vpack.c.b16 %v934, %v933
      %937 = vst [vmem:[#allocation1] ss:$4 sm:$0xff] %v302
      %v938 = vld.sshfl [vmem:[#allocation1] sm:$0xff pattern:$0x73625140]
      %v940 = vld.sshfl [vmem:[#allocation1 + $0x8] sm:$0xff pattern:$0x73625140]
      %v942 = vld.sshfl [vmem:[#allocation1 + $0x10] sm:$0xff pattern:$0x73625140]
      %944 = vrot.lane.b32.xlu0 %v938, 92
      %v945 = vpop.permute.xlu0 %944
      %946 = vrot.lane.b32.xlu0 %v940, 92
      %v947 = vpop.permute.xlu0 %946
      %948 = vrot.lane.b32.xlu0 %v942, 92
      %v949 = vpop.permute.xlu0 %948
      %vm950 = vcmask 752640
      %v951 = vsel %vm950, %v945, %v947
      %v952 = vsel %vm950, %v947, %v949
      %v954 = vsel %vm330, %v935, 0
      %v957 = vsel %vm330, %v936, 0
      %v960 = vsel %vm337, %v951, 0
      %v963 = vsel %vm337, %v952, 0
      %v966 = vsel %vm337, %v949, 0
      %968 = vmatpush.bf16.msra.mxu0 0
      %969 = vmatpush.bf16.msra.mxu0 0
      %970 = vmatpush.bf16.msra.mxu0 0
      %971 = vmatpush.bf16.msra.mxu0 0
      %972 = vmatpush.bf16.msra.mxu0 0
      %973 = vmatpush.bf16.msra.mxu0 0
      %974 = vmatpush.bf16.msra.mxu0 0
      %975 = vmatpush.bf16.msra.mxu0 %v960
      %976 = vmatmul.bf16.gmra.mxu0 %v954
      %v977 = vpop.f32.mrf.mxu0
      %v978 = vadd.f32 0.0, %v977
      %v979 = vpop.f32.mrf.mxu0
      %v980 = vadd.f32 0.0, %v979
      %981 = vmatmul.bf16.gmra.mxu0 %v957
      %v982 = vpop.f32.mrf.mxu0
      %v983 = vadd.f32 0.0, %v982
      %v984 = vpop.f32.mrf.mxu0
      %v985 = vadd.f32 0.0, %v984
      %986 = vdwg.mxu0
      %987 = vmatpush.bf16.msra.mxu0 0
      %988 = vmatpush.bf16.msra.mxu0 0
      %989 = vmatpush.bf16.msra.mxu0 0
      %990 = vmatpush.bf16.msra.mxu0 0
      %991 = vmatpush.bf16.msra.mxu0 0
      %992 = vmatpush.bf16.msra.mxu0 0
      %993 = vmatpush.bf16.msra.mxu0 0
      %994 = vmatpush.bf16.msra.mxu0 %v963
      %995 = vmatmul.bf16.gmra.mxu0 %v954
      %v996 = vpop.f32.mrf.mxu0
      %v997 = vadd.f32 0.0, %v996
      %v998 = vpop.f32.mrf.mxu0
      %v999 = vadd.f32 0.0, %v998
      %1000 = vmatmul.bf16.gmra.mxu0 %v957
      %v1001 = vpop.f32.mrf.mxu0
      %v1002 = vadd.f32 0.0, %v1001
      %v1003 = vpop.f32.mrf.mxu0
      %v1004 = vadd.f32 0.0, %v1003
      %1005 = vdwg.mxu0
      %1006 = vmatpush.bf16.msra.mxu0 0
      %1007 = vmatpush.bf16.msra.mxu0 0
      %1008 = vmatpush.bf16.msra.mxu0 0
      %1009 = vmatpush.bf16.msra.mxu0 0
      %1010 = vmatpush.bf16.msra.mxu0 0
      %1011 = vmatpush.bf16.msra.mxu0 0
      %1012 = vmatpush.bf16.msra.mxu0 0
      %1013 = vmatpush.bf16.msra.mxu0 %v966
      %1014 = vmatmul.bf16.gmra.mxu0 %v954
      %v1015 = vpop.f32.mrf.mxu0
      %v1016 = vadd.f32 0.0, %v1015
      %v1017 = vpop.f32.mrf.mxu0
      %v1018 = vadd.f32 0.0, %v1017
      %1019 = vmatmul.bf16.gmra.mxu0 %v957
      %v1020 = vpop.f32.mrf.mxu0
      %v1021 = vadd.f32 0.0, %v1020
      %v1022 = vpop.f32.mrf.mxu0
      %v1023 = vadd.f32 0.0, %v1022
      %1024 = vdwg.mxu0
      %v1025 = vadd.f32 %v915, %v978
      %v1026 = vadd.f32 %v916, %v997
      %v1027 = vadd.f32 %v917, %v1016
      %v1028 = vadd.f32 %v918, %v980
      %v1029 = vadd.f32 %v919, %v999
      %v1030 = vadd.f32 %v920, %v1018
      %v1031 = vadd.f32 %v921, %v983
      %v1032 = vadd.f32 %v922, %v1002
      %v1033 = vadd.f32 %v923, %v1021
      %v1034 = vadd.f32 %v924, %v985
      %v1035 = vadd.f32 %v925, %v1004
      %v1036 = vadd.f32 %v926, %v1023
      %v1041 = vunpack.c.l.b16 %v293
      %v1042 = vunpack.c.l.b16 %v294
      %v1043 = vunpack.c.l.b16 %v295
      %v1044 = vunpack.c.l.b16 %v296
      %v1045 = vpack.c.b16 %v1042, %v1041
      %v1046 = vpack.c.b16 %v1044, %v1043
      %1047 = vst [vmem:[#allocation1] ss:$4 sm:$0xff] %v302
      %v1048 = vld.sshfl [vmem:[#allocation1] sm:$0xff pattern:$0x73625140]
      %v1050 = vld.sshfl [vmem:[#allocation1 + $0x8] sm:$0xff pattern:$0x73625140]
      %v1052 = vld.sshfl [vmem:[#allocation1 + $0x10] sm:$0xff pattern:$0x73625140]
      %1054 = vrot.lane.b32.xlu0 %v1048, 91
      %v1055 = vpop.permute.xlu0 %1054
      %1056 = vrot.lane.b32.xlu0 %v1050, 91
      %v1057 = vpop.permute.xlu0 %1056
      %1058 = vrot.lane.b32.xlu0 %v1052, 91
      %v1059 = vpop.permute.xlu0 %1058
      %vm1060 = vcmask 744448
      %v1061 = vsel %vm1060, %v1055, %v1057
      %v1062 = vsel %vm1060, %v1057, %v1059
      %v1064 = vsel %vm330, %v1045, 0
      %v1067 = vsel %vm330, %v1046, 0
      %v1070 = vsel %vm337, %v1061, 0
      %v1073 = vsel %vm337, %v1062, 0
      %v1076 = vsel %vm337, %v1059, 0
      %1078 = vmatpush.bf16.msra.mxu0 0
      %1079 = vmatpush.bf16.msra.mxu0 0
      %1080 = vmatpush.bf16.msra.mxu0 0
      %1081 = vmatpush.bf16.msra.mxu0 0
      %1082 = vmatpush.bf16.msra.mxu0 0
      %1083 = vmatpush.bf16.msra.mxu0 0
      %1084 = vmatpush.bf16.msra.mxu0 0
      %1085 = vmatpush.bf16.msra.mxu0 %v1070
      %1086 = vmatmul.bf16.gmra.mxu0 %v1064
      %v1087 = vpop.f32.mrf.mxu0
      %v1088 = vadd.f32 0.0, %v1087
      %v1089 = vpop.f32.mrf.mxu0
      %v1090 = vadd.f32 0.0, %v1089
      %1091 = vmatmul.bf16.gmra.mxu0 %v1067
      %v1092 = vpop.f32.mrf.mxu0
      %v1093 = vadd.f32 0.0, %v1092
      %v1094 = vpop.f32.mrf.mxu0
      %v1095 = vadd.f32 0.0, %v1094
      %1096 = vdwg.mxu0
      %1097 = vmatpush.bf16.msra.mxu0 0
      %1098 = vmatpush.bf16.msra.mxu0 0
      %1099 = vmatpush.bf16.msra.mxu0 0
      %1100 = vmatpush.bf16.msra.mxu0 0
      %1101 = vmatpush.bf16.msra.mxu0 0
      %1102 = vmatpush.bf16.msra.mxu0 0
      %1103 = vmatpush.bf16.msra.mxu0 0
      %1104 = vmatpush.bf16.msra.mxu0 %v1073
      %1105 = vmatmul.bf16.gmra.mxu0 %v1064
      %v1106 = vpop.f32.mrf.mxu0
      %v1107 = vadd.f32 0.0, %v1106
      %v1108 = vpop.f32.mrf.mxu0
      %v1109 = vadd.f32 0.0, %v1108
      %1110 = vmatmul.bf16.gmra.mxu0 %v1067
      %v1111 = vpop.f32.mrf.mxu0
      %v1112 = vadd.f32 0.0, %v1111
      %v1113 = vpop.f32.mrf.mxu0
      %v1114 = vadd.f32 0.0, %v1113
      %1115 = vdwg.mxu0
      %1116 = vmatpush.bf16.msra.mxu0 0
      %1117 = vmatpush.bf16.msra.mxu0 0
      %1118 = vmatpush.bf16.msra.mxu0 0
      %1119 = vmatpush.bf16.msra.mxu0 0
      %1120 = vmatpush.bf16.msra.mxu0 0
      %1121 = vmatpush.bf16.msra.mxu0 0
      %1122 = vmatpush.bf16.msra.mxu0 0
      %1123 = vmatpush.bf16.msra.mxu0 %v1076
      %1124 = vmatmul.bf16.gmra.mxu0 %v1064
      %v1125 = vpop.f32.mrf.mxu0
      %v1126 = vadd.f32 0.0, %v1125
      %v1127 = vpop.f32.mrf.mxu0
      %v1128 = vadd.f32 0.0, %v1127
      %1129 = vmatmul.bf16.gmra.mxu0 %v1067
      %v1130 = vpop.f32.mrf.mxu0
      %v1131 = vadd.f32 0.0, %v1130
      %v1132 = vpop.f32.mrf.mxu0
      %v1133 = vadd.f32 0.0, %v1132
      %1134 = vdwg.mxu0
      %v1135 = vadd.f32 %v1025, %v1088
      %v1136 = vadd.f32 %v1026, %v1107
      %v1137 = vadd.f32 %v1027, %v1126
      %v1138 = vadd.f32 %v1028, %v1090
      %v1139 = vadd.f32 %v1029, %v1109
      %v1140 = vadd.f32 %v1030, %v1128
      %v1141 = vadd.f32 %v1031, %v1093
      %v1142 = vadd.f32 %v1032, %v1112
      %v1143 = vadd.f32 %v1033, %v1131
      %v1144 = vadd.f32 %v1034, %v1095
      %v1145 = vadd.f32 %v1035, %v1114
      %v1146 = vadd.f32 %v1036, %v1133
      %v1151 = vunpack.c.l.b16 %v298
      %v1152 = vunpack.c.l.b16 %v299
      %v1153 = vunpack.c.l.b16 %v300
      %v1154 = vunpack.c.l.b16 %v301
      %v1155 = vpack.c.b16 %v1152, %v1151
      %v1156 = vpack.c.b16 %v1154, %v1153
      %1157 = vst [vmem:[#allocation1] ss:$4 sm:$0xff] %v302
      %v1158 = vld.sshfl [vmem:[#allocation1] sm:$0xff pattern:$0x73625140]
      %v1160 = vld.sshfl [vmem:[#allocation1 + $0x8] sm:$0xff pattern:$0x73625140]
      %v1162 = vld.sshfl [vmem:[#allocation1 + $0x10] sm:$0xff pattern:$0x73625140]
      %1164 = vrot.lane.b32.xlu0 %v1158, 90
      %v1165 = vpop.permute.xlu0 %1164
      %1166 = vrot.lane.b32.xlu0 %v1160, 90
      %v1167 = vpop.permute.xlu0 %1166
      %1168 = vrot.lane.b32.xlu0 %v1162, 90
      %v1169 = vpop.permute.xlu0 %1168
      %vm1170 = vcmask 736256
      %v1171 = vsel %vm1170, %v1165, %v1167
      %v1172 = vsel %vm1170, %v1167, %v1169
      %v1174 = vsel %vm330, %v1155, 0
      %v1177 = vsel %vm330, %v1156, 0
      %v1180 = vsel %vm337, %v1171, 0
      %v1183 = vsel %vm337, %v1172, 0
      %v1186 = vsel %vm337, %v1169, 0
      %1188 = vmatpush.bf16.msra.mxu0 0
      %1189 = vmatpush.bf16.msra.mxu0 0
      %1190 = vmatpush.bf16.msra.mxu0 0
      %1191 = vmatpush.bf16.msra.mxu0 0
      %1192 = vmatpush.bf16.msra.mxu0 0
      %1193 = vmatpush.bf16.msra.mxu0 0
      %1194 = vmatpush.bf16.msra.mxu0 0
      %1195 = vmatpush.bf16.msra.mxu0 %v1180
      %1196 = vmatmul.bf16.gmra.mxu0 %v1174
      %v1197 = vpop.f32.mrf.mxu0
      %v1198 = vadd.f32 0.0, %v1197
      %v1199 = vpop.f32.mrf.mxu0
      %v1200 = vadd.f32 0.0, %v1199
      %1201 = vmatmul.bf16.gmra.mxu0 %v1177
      %v1202 = vpop.f32.mrf.mxu0
      %v1203 = vadd.f32 0.0, %v1202
      %v1204 = vpop.f32.mrf.mxu0
      %v1205 = vadd.f32 0.0, %v1204
      %1206 = vdwg.mxu0
      %1207 = vmatpush.bf16.msra.mxu0 0
      %1208 = vmatpush.bf16.msra.mxu0 0
      %1209 = vmatpush.bf16.msra.mxu0 0
      %1210 = vmatpush.bf16.msra.mxu0 0
      %1211 = vmatpush.bf16.msra.mxu0 0
      %1212 = vmatpush.bf16.msra.mxu0 0
      %1213 = vmatpush.bf16.msra.mxu0 0
      %1214 = vmatpush.bf16.msra.mxu0 %v1183
      %1215 = vmatmul.bf16.gmra.mxu0 %v1174
      %v1216 = vpop.f32.mrf.mxu0
      %v1217 = vadd.f32 0.0, %v1216
      %v1218 = vpop.f32.mrf.mxu0
      %v1219 = vadd.f32 0.0, %v1218
      %1220 = vmatmul.bf16.gmra.mxu0 %v1177
      %v1221 = vpop.f32.mrf.mxu0
      %v1222 = vadd.f32 0.0, %v1221
      %v1223 = vpop.f32.mrf.mxu0
      %v1224 = vadd.f32 0.0, %v1223
      %1225 = vdwg.mxu0
      %1226 = vmatpush.bf16.msra.mxu0 0
      %1227 = vmatpush.bf16.msra.mxu0 0
      %1228 = vmatpush.bf16.msra.mxu0 0
      %1229 = vmatpush.bf16.msra.mxu0 0
      %1230 = vmatpush.bf16.msra.mxu0 0
      %1231 = vmatpush.bf16.msra.mxu0 0
      %1232 = vmatpush.bf16.msra.mxu0 0
      %1233 = vmatpush.bf16.msra.mxu0 %v1186
      %1234 = vmatmul.bf16.gmra.mxu0 %v1174
      %v1235 = vpop.f32.mrf.mxu0
      %v1236 = vadd.f32 0.0, %v1235
      %v1237 = vpop.f32.mrf.mxu0
      %v1238 = vadd.f32 0.0, %v1237
      %1239 = vmatmul.bf16.gmra.mxu0 %v1177
      %v1240 = vpop.f32.mrf.mxu0
      %v1241 = vadd.f32 0.0, %v1240
      %v1242 = vpop.f32.mrf.mxu0
      %v1243 = vadd.f32 0.0, %v1242
      %1244 = vdwg.mxu0
      %v1245 = vadd.f32 %v1135, %v1198
      %v1246 = vadd.f32 %v1136, %v1217
      %v1247 = vadd.f32 %v1137, %v1236
      %v1248 = vadd.f32 %v1138, %v1200
      %v1249 = vadd.f32 %v1139, %v1219
      %v1250 = vadd.f32 %v1140, %v1238
      %v1251 = vadd.f32 %v1141, %v1203
      %v1252 = vadd.f32 %v1142, %v1222
      %v1253 = vadd.f32 %v1143, %v1241
      %v1254 = vadd.f32 %v1144, %v1205
      %v1255 = vadd.f32 %v1145, %v1224
      %v1256 = vadd.f32 %v1146, %v1243
      %1258 = vset.pattern.permute.xlu0 0
      %1259 = vperm.xlu0 %1258, %v251
      %v1260 = vpop.permute.xlu0 %1259
      %1263 = vset.pattern.permute.xlu0 0
      %1264 = vperm.xlu0 %1263, %v252
      %v1265 = vpop.permute.xlu0 %1264
      %1268 = vset.pattern.permute.xlu0 0
      %1269 = vperm.xlu0 %1268, %v253
      %v1270 = vpop.permute.xlu0 %1269
      %1273 = vset.pattern.permute.xlu0 0
      %1274 = vperm.xlu0 %1273, %v254
      %v1275 = vpop.permute.xlu0 %1274
      %v1277 = vadd.f32 %v1245, %v1260
      %v1278 = vadd.f32 %v1246, %v1260
      %v1279 = vadd.f32 %v1247, %v1260
      %v1280 = vadd.f32 %v1248, %v1265
      %v1281 = vadd.f32 %v1249, %v1265
      %v1282 = vadd.f32 %v1250, %v1265
      %v1283 = vadd.f32 %v1251, %v1270
      %v1284 = vadd.f32 %v1252, %v1270
      %v1285 = vadd.f32 %v1253, %v1270
      %v1286 = vadd.f32 %v1254, %v1275
      %v1287 = vadd.f32 %v1255, %v1275
      %v1288 = vadd.f32 %v1256, %v1275
      %v1289 = vmax.f32 %v1277, 0.0
      %v1290 = vmax.f32 %v1278, 0.0
      %v1291 = vmax.f32 %v1279, 0.0
      %v1292 = vmax.f32 %v1280, 0.0
      %v1293 = vmax.f32 %v1281, 0.0
      %v1294 = vmax.f32 %v1282, 0.0
      %v1295 = vmax.f32 %v1283, 0.0
      %v1296 = vmax.f32 %v1284, 0.0
      %v1297 = vmax.f32 %v1285, 0.0
      %v1298 = vmax.f32 %v1286, 0.0
      %v1299 = vmax.f32 %v1287, 0.0
      %v1300 = vmax.f32 %v1288, 0.0
      %v1302 = vperm.slane %v255, 0
      %v1303 = vperm.slane %v255, 1
      %v1304 = vperm.slane %v255, 2
      %v1308 = vmul.f32 %v1289, %v1302
      %v1309 = vmul.f32 %v1290, %v1303
      %v1310 = vmul.f32 %v1291, %v1304
      %v1311 = vmul.f32 %v1292, %v1302
      %v1312 = vmul.f32 %v1293, %v1303
      %v1313 = vmul.f32 %v1294, %v1304
      %v1314 = vmul.f32 %v1295, %v1302
      %v1315 = vmul.f32 %v1296, %v1303
      %v1316 = vmul.f32 %v1297, %v1304
      %v1317 = vmul.f32 %v1298, %v1302
      %v1318 = vmul.f32 %v1299, %v1303
      %v1319 = vmul.f32 %v1300, %v1304
      %v1320 = vadd.f32 %v1308, %v1309
      %vm1321 = vcmask 244736
      %v1322 = vsel %vm1321, %v1310, 0.0
      %v1323 = vadd.f32 %v1320, %v1322
      %1324 = vadd.xlane.f32.xlu0 %v1323
      %v1325 = vpop.xlane.xlu0 %1324
      %v1326 = vadd.f32 %v1311, %v1312
      %v1327 = vsel %vm1321, %v1313, 0.0
      %v1328 = vadd.f32 %v1326, %v1327
      %1329 = vadd.xlane.f32.xlu0 %v1328
      %v1330 = vpop.xlane.xlu0 %1329
      %v1331 = vadd.f32 %v1314, %v1315
      %v1332 = vsel %vm1321, %v1316, 0.0
      %v1333 = vadd.f32 %v1331, %v1332
      %1334 = vadd.xlane.f32.xlu0 %v1333
      %v1335 = vpop.xlane.xlu0 %1334
      %v1336 = vadd.f32 %v1317, %v1318
      %v1337 = vsel %vm1321, %v1319, 0.0
      %v1338 = vadd.f32 %v1336, %v1337
      %1339 = vadd.xlane.f32.xlu0 %v1338
      %v1340 = vpop.xlane.xlu0 %1339
      %vm1341 = vcmask 261120
      %v1343 = vsel %vm1341, %v256, 0
      %1345 = vmatpush.msra.mxu0 0.0
      %1346 = vmatpush.msra.mxu0 0.0
      %1347 = vmatpush.msra.mxu0 0.0
      %1348 = vmatpush.msra.mxu0 0.0
      %1349 = vmatpush.msra.mxu0 0.0
      %1350 = vmatpush.msra.mxu0 0.0
      %1351 = vmatpush.msra.mxu0 0.0
      %1352 = vmatpush.msra.mxu0 0.0
      %1353 = vmatpush.msra.mxu0 0.0
      %1354 = vmatpush.msra.mxu0 0.0
      %1355 = vmatpush.msra.mxu0 0.0
      %1356 = vmatpush.msra.mxu0 0.0
      %1357 = vmatpush.msra.mxu0 %v1340
      %1358 = vmatpush.msra.mxu0 %v1335
      %1359 = vmatpush.msra.mxu0 %v1330
      %1360 = vmatpush.msra.mxu0 %v1325
      %1361 = vmatmul.f32.gmra.mxu0 %v1343
      %v1362 = vpop.f32.mrf.mxu0
      %v1363 = vadd.f32 %v257, %v1362
      %1364 = vdwg.mxu0
      %v1365 = vxor.u32 %v1363, 2147483648
      %v1366 = vmul.f32 %v1365, 1.442695
      %v1367 = vpow.pop %v1366
      %v1368 = vadd.f32 %v1367, 1.0
      %v1369 = vrcp.pop %v1368
      %v1370 = vmul.f32 %v1368, %v1369
      %v1371 = vsub.f32 1.0, %v1370
      %v1372 = vmul.f32 %v1369, %v1371
      %v1373 = vadd.f32 %v1369, %v1372
      %vm1374 = vweird.f32 %v1368
      %vm1375 = vweird.f32 %v1369
      %vm1376 = vmor %vm1374, %vm1375
      %v1377 = vsel %vm1376, %v1369, %v1373
      %v1378 = vand.u32 2147483647, %v1368
      %vm1379 = vcmp.eq.f32.partialorder %v1378, 8.507059e+37
      %v1380 = vand.u32 %v1368, 2147483648
      %v1381 = vor.u32 1.1754944e-38, %v1380
      %v1382 = vsel %vm1379, %v1381, %v1377
      %v1383 = vmul.f32 1.0, %v1382
      %vm1384 = vcmask 1024
      %1385 = vst.msk [vmem:[%s249] sm:$0x3] %vm1384, %v1383
      %p1386 = scmp.lt.s32.totalorder %s17, 1
      %s1387 = scalar_select %p1386, %s17, 1
      %s1388 = smul.addr %s1387, 2
      %s1389 = scalar_lea.vmem %s6, %s1388
      // Predicated region
      $region45: #{model_forward.1} parent=43 // pred_check
        %p1390 = pneg %p166
      $region46: #{model_forward.1} parent=43 // pred_check_branch
        %1392 = sbr.rel (%p1390) target = $region48
      $region47: #{model_forward.1} parent=43 // pred_region
        _
      $region48: #{model_forward.1} parent=43 // pred_fallthru
        _
    $region44: #{model_forward.1} parent=5 // pred_fallthru
      _
    %p1393 = scmp.le.s32.totalorder 2, %s12
    // Predicated region
    $region49: #{model_forward.1} parent=5 // pred_check
      %p1394 = pneg %p1393
    $region50: #{model_forward.1} parent=5 // pred_check_branch
      %1396 = sbr.rel (%p1394) target = $region52
    $region51: #{model_forward.1} parent=5 // pred_region
      %s1397 = ssub.s32 %s12, 2
      // Predicated region
      $region53: #{model_forward.1} parent=51 // pred_check
        %p1398 = pneg %p172
      $region54: #{model_forward.1} parent=51 // pred_check_branch
        %1400 = sbr.rel (%p1398) target = $region56
      $region55: #{model_forward.1} parent=51 // pred_region
        %p1401 = scmp.lt.s32.totalorder %s18, 1
        %s1402 = scalar_select %p1401, %s18, 1
        %s1403 = smul.addr %s1402, 2
        %s1404 = scalar_lea.vmem %s6, %s1403
      $region56: #{model_forward.1} parent=51 // pred_fallthru
        _
    $region52: #{model_forward.1} parent=5 // pred_fallthru
      _
  $region6: #{model_forward.1} parent=0 // loop_footer
    %s16 = sadd.s32 1, %s12
  $region7: #{model_forward.1} parent=0 // loop_footer_branch
    %11 = sbr.rel target = $region3
  $region8: #{model_forward.1} parent=0 // loop_exit
    _

</llo_original>
